<compile_context>
chip_gen: v7x
topology: tpu7x:2x2x1
jax: 0.10.0
libtpu: 0.0.40
codegen_flags: <defaults>
</compile_context>

<pallas_src>
import functools
import math

import jax
import jax.numpy as jnp
from jax import lax
from jax.experimental import pallas as pl
from jax.experimental.pallas import tpu as pltpu


def _round_up(x, m):
    return ((x + m - 1) // m) * m


def _largest_divisor_leq(n, cap):
    cap = max(1, min(n, cap))
    for d in range(cap, 0, -1):
        if n % d == 0:
            return d
    return 1


def _vmem_limit_bytes():
    # ~75% of the per-core VMEM capacity, clamped to [48 MiB, 96 MiB]:
    #   v7x (64 MiB physical) -> 48 MiB, v5e/v6e (128 MiB) -> 96 MiB.
    try:
        cap = int(pltpu.get_tpu_info().vmem_capacity_bytes)
    except Exception:
        cap = 64 * 1024 * 1024
    return min(96 * 1024 * 1024, max(48 * 1024 * 1024, (cap * 3) // 4))


def _flash_attn_kernel(q_ref, k_ref, v_ref, o_ref, m_sc, l_sc, acc_sc,
                       *, t_true, blk_kv, mask_kv):
    """One (batch-block, q-tile, kv-tile) step of online-softmax attention.

    q_ref : (Bblk, blk_q, C)   input dtype, pre-scaled by 1/sqrt(C) (time-major -> MXU-native lhs)
    k_ref : (Bblk, C, blk_kv)  input dtype  (channel-major, lane-dense KV stream)
    v_ref : (Bblk, C, blk_kv)  input dtype
    o_ref : (Bblk, C, blk_q)   input dtype  (channel-major: lane axis = blk_q -> dense stores)
    m_sc, l_sc : (Bblk, blk_q, 1) f32 running max / denominator
    acc_sc     : (Bblk, C, blk_q) f32 running numerator (lane-dense)
    """
    ki = pl.program_id(2)

    @pl.when(ki == 0)
    def _init():
        m_sc[...] = jnp.full_like(m_sc, -jnp.inf)
        l_sc[...] = jnp.zeros_like(l_sc)
        acc_sc[...] = jnp.zeros_like(acc_sc)

    # Logits: NN-form matmul (lhs contracts its minor dim, rhs its major dim), f32 accumulation.
    s = jnp.einsum("btc,bcs->bts", q_ref[...], k_ref[...],
                   preferred_element_type=jnp.float32)       # (Bblk, blk_q, blk_kv)

    if mask_kv:
        # Only the final kv tile can contain padded columns -> gate the per-element select.
        def _apply_mask(x):
            col = ki * blk_kv + lax.broadcasted_iota(jnp.int32, x.shape, 2)
            return jnp.where(col < t_true, x, -1e30)

        s = lax.cond((ki + 1) * blk_kv > t_true, _apply_mask, lambda x: x, s)

    m_prev = m_sc[...]
    m_new = jnp.maximum(m_prev, jnp.max(s, axis=-1, keepdims=True))
    alpha = jnp.exp(m_prev - m_new)                          # (Bblk, blk_q, 1)
    p = jnp.exp(s - m_new)                                   # f32, unnormalized probabilities
    l_sc[...] = alpha * l_sc[...] + jnp.sum(p, axis=-1, keepdims=True)
    m_sc[...] = m_new

    # P@V with channel-major output: NT-form matmul, both operands lane-dense, no tile transposes.
    # p is cast back to the input dtype first (matches the reference's softmax-dtype cast).
    pv = jnp.einsum("bcs,bts->bct", v_ref[...], p.astype(v_ref.dtype),
                    preferred_element_type=jnp.float32)      # (Bblk, C, blk_q)
    alpha_t = jnp.swapaxes(alpha, 1, 2)                      # (Bblk, 1, blk_q) tiny relayout
    acc_sc[...] = alpha_t * acc_sc[...] + pv

    @pl.when(ki == pl.num_programs(2) - 1)
    def _finalize():
        inv_l = jnp.swapaxes(pl.reciprocal(l_sc[...], approx=False), 1, 2)   # (Bblk, 1, blk_q)
        o_ref[...] = (acc_sc[...] * inv_l).astype(o_ref.dtype)


def qkv_attention_legacy(qkv, n_heads):
    """qkv: [N, H*3*C, T] -> [N, H*C, T], matching QKVAttentionLegacy.forward."""
    bs, width, length = qkv.shape
    assert width % (3 * n_heads) == 0
    ch = width // (3 * n_heads)
    B = bs * n_heads

    x = qkv.reshape(B, 3 * ch, length)
    q = x[:, :ch, :]            # (B, C, T)
    k = x[:, ch:2 * ch, :]      # (B, C, T)
    v = x[:, 2 * ch:, :]        # (B, C, T)

    # ---- tiling: pad T up to the target tile instead of shrinking tiles ----------------------
    if length <= 512:
        t_pad = _round_up(length, 128)
        blk_q = t_pad
        blk_kv = t_pad
    else:
        blk_kv = 512
        t_pad = _round_up(length, 512)
        # Larger q tiles halve the dominant KV re-stream HBM traffic when T is long enough.
        blk_q = 1024 if (t_pad % 1024 == 0 and t_pad >= 2048) else 512
    mask_kv = (t_pad != length)

    if mask_kv:
        pad = t_pad - length
        q = jnp.pad(q, ((0, 0), (0, 0), (0, pad)))
        k = jnp.pad(k, ((0, 0), (0, 0), (0, pad)))
        v = jnp.pad(v, ((0, 0), (0, 0), (0, pad)))

    # q time-major, with the full 1/sqrt(C) scale folded into this one-time copy
    # (reference applies 1/sqrt(sqrt(C)) to q and k separately; combined that is 1/sqrt(C)).
    scale = 1.0 / math.sqrt(ch)
    q_t = jnp.swapaxes(q, 1, 2) * scale                      # (B, T_pad, C), input dtype

    # ---- batch-block selection ----------------------------------------------------------------
    n_q_tiles = t_pad // blk_q
    n_kv_tiles = t_pad // blk_kv
    # Cap bblk so the f32 score tile (bblk * blk_q * blk_kv * 4B) stays <= ~8 MiB.
    bblk = _largest_divisor_leq(B, max(1, 4096 // blk_q))
    # Keep a non-degenerate parallel grid so both v7x TensorCores get work.
    while bblk > 1 and (B // bblk) * n_q_tiles < 2:
        bblk = _largest_divisor_leq(B, bblk - 1)

    grid = (B // bblk, n_q_tiles, n_kv_tiles)

    kernel = functools.partial(
        _flash_attn_kernel, t_true=length, blk_kv=blk_kv, mask_kv=mask_kv)

    out = pl.pallas_call(
        kernel,
        out_shape=jax.ShapeDtypeStruct((B, ch, t_pad), qkv.dtype),
        grid_spec=pltpu.PrefetchScalarGridSpec(
            num_scalar_prefetch=0,
            grid=grid,
            in_specs=[
                pl.BlockSpec((bblk, blk_q, ch), lambda b, qi, ki: (b, qi, 0)),
                pl.BlockSpec((bblk, ch, blk_kv), lambda b, qi, ki: (b, 0, ki)),
                pl.BlockSpec((bblk, ch, blk_kv), lambda b, qi, ki: (b, 0, ki)),
            ],
            out_specs=pl.BlockSpec((bblk, ch, blk_q), lambda b, qi, ki: (b, 0, qi)),
            scratch_shapes=[
                pltpu.VMEM((bblk, blk_q, 1), jnp.float32),    # running max m
                pltpu.VMEM((bblk, blk_q, 1), jnp.float32),    # running denominator l
                pltpu.VMEM((bblk, ch, blk_q), jnp.float32),   # channel-major accumulator
            ],
        ),
        compiler_params=pltpu.CompilerParams(
            dimension_semantics=("parallel", "parallel", "arbitrary"),
            vmem_limit_bytes=_vmem_limit_bytes(),
        ),
    )(q_t, k, v)

    out = out[:, :, :length]                       # drop padded time columns; already (B, C, T)
    return out.reshape(bs, n_heads * ch, length)


def _reference(qkv, n_heads):
    # pure-JAX reference mirroring the PyTorch forward
    bs, width, length = qkv.shape
    ch = width // (3 * n_heads)
    x = qkv.reshape(bs * n_heads, 3 * ch, length)
    q, k, v = x[:, :ch], x[:, ch:2 * ch], x[:, 2 * ch:]
    scale = 1.0 / math.sqrt(math.sqrt(ch))
    w = jnp.einsum("bct,bcs->bts", q * scale, k * scale)
    w = jax.nn.softmax(w.astype(jnp.float32), axis=-1).astype(w.dtype)
    a = jnp.einsum("bts,bcs->bct", w, v)
    return a.reshape(bs, -1, length)


if __name__ == "__main__":
    # QKVAttentionLegacy(n_heads) has no learnable parameters.
    n_heads = 2
    batch = 2
    ch = 16                       # per-head channels
    width = n_heads * 3 * ch      # 96

    # Case 1: tiny sequence -> single tile, exercises the padding/mask path.
    length = 8
    qkv = jax.random.normal(jax.random.PRNGKey(0), (batch, width, length), dtype=jnp.float32)
    out = jax.block_until_ready(qkv_attention_legacy(qkv, n_heads))
    ref = _reference(qkv, n_heads)
    assert out.shape == (batch, n_heads * ch, length)
    assert jnp.allclose(out, ref, atol=2e-3, rtol=2e-3), float(jnp.max(jnp.abs(out - ref)))

    # Case 2: multi-tile sequence -> online-softmax accumulation over kv tiles + masked last tile.
    length2 = 600
    qkv2 = jax.random.normal(jax.random.PRNGKey(1), (1, width, length2), dtype=jnp.float32)
    out2 = jax.block_until_ready(qkv_attention_legacy(qkv2, n_heads))
    ref2 = _reference(qkv2, n_heads)
    assert out2.shape == (1, n_heads * ch, length2)
    assert jnp.allclose(out2, ref2, atol=2e-3, rtol=2e-3), float(jnp.max(jnp.abs(out2 - ref2)))

    print("KERNEL_OK")
</pallas_src>

<mosaic_0001>
module attributes {stable_mosaic.version = 11 : i64} {
  func.func @_flash_attn_kernel(%arg0: i32, %arg1: i32, %arg2: i32, %arg3: memref<2x128x16xf32, #tpu.memory_space<vmem>>, %arg4: memref<2x16x128xf32, #tpu.memory_space<vmem>>, %arg5: memref<2x16x128xf32, #tpu.memory_space<vmem>>, %arg6: memref<2x16x128xf32, #tpu.memory_space<vmem>>, %arg7: memref<2x128x1xf32, #tpu.memory_space<vmem>>, %arg8: memref<2x128x1xf32, #tpu.memory_space<vmem>>, %arg9: memref<2x16x128xf32, #tpu.memory_space<vmem>>) attributes {dimension_semantics = [#tpu.dimension_semantics<parallel>, #tpu.dimension_semantics<parallel>, #tpu.dimension_semantics<arbitrary>], iteration_bounds = array<i64: 2, 1, 1>, scalar_prefetch = 0 : i64, scratch_operands = 3 : i64, tpu.core_type = #tpu.core_type<tc>, window_params = [{transform_indices = @transform_0, window_bounds = array<i64: 2, 128, 16>}, {transform_indices = @transform_1, window_bounds = array<i64: 2, 16, 128>}, {transform_indices = @transform_2, window_bounds = array<i64: 2, 16, 128>}, {transform_indices = @transform_3, window_bounds = array<i64: 2, 16, 128>}]} {
    %c0_i32 = arith.constant 0 : i32
    %0 = arith.cmpi eq, %arg2, %c0_i32 : i32
    %1 = arith.extui %0 : i1 to i32
    %c0_i32_0 = arith.constant 0 : i32
    %2 = arith.cmpi ne, %1, %c0_i32_0 : i32
    scf.if %2 {
      %cst_33 = arith.constant 0xFF800000 : f32
      %39 = vector.broadcast %cst_33 : f32 to vector<2x128x1xf32>
      %c0_34 = arith.constant 0 : index
      %c0_35 = arith.constant 0 : index
      %c0_36 = arith.constant 0 : index
      %40 = vector.load %arg7[%c0_34, %c0_35, %c0_36] : memref<2x128x1xf32, #tpu.memory_space<vmem>>, vector<2x128x1xf32>
      tpu.vector_store %arg7[%c0_34, %c0_35, %c0_36], %39 {strides = array<i32>} : memref<2x128x1xf32, #tpu.memory_space<vmem>>, vector<2x128x1xf32>,
      %cst_37 = arith.constant 0.000000e+00 : f32
      %41 = vector.broadcast %cst_37 : f32 to vector<2x128x1xf32>
      %c0_38 = arith.constant 0 : index
      %c0_39 = arith.constant 0 : index
      %c0_40 = arith.constant 0 : index
      %42 = vector.load %arg8[%c0_38, %c0_39, %c0_40] : memref<2x128x1xf32, #tpu.memory_space<vmem>>, vector<2x128x1xf32>
      tpu.vector_store %arg8[%c0_38, %c0_39, %c0_40], %41 {strides = array<i32>} : memref<2x128x1xf32, #tpu.memory_space<vmem>>, vector<2x128x1xf32>,
      %cst_41 = arith.constant 0.000000e+00 : f32
      %43 = vector.broadcast %cst_41 : f32 to vector<2x16x128xf32>
      %c0_42 = arith.constant 0 : index
      %c0_43 = arith.constant 0 : index
      %c0_44 = arith.constant 0 : index
      %44 = vector.load %arg9[%c0_42, %c0_43, %c0_44] : memref<2x16x128xf32, #tpu.memory_space<vmem>>, vector<2x16x128xf32>
      tpu.vector_store %arg9[%c0_42, %c0_43, %c0_44], %43 {strides = array<i32>} : memref<2x16x128xf32, #tpu.memory_space<vmem>>, vector<2x16x128xf32>,
    } else {
    }
    %c0 = arith.constant 0 : index
    %c0_1 = arith.constant 0 : index
    %c0_2 = arith.constant 0 : index
    %3 = vector.load %arg3[%c0, %c0_1, %c0_2] : memref<2x128x16xf32, #tpu.memory_space<vmem>>, vector<2x128x16xf32>
    %c0_3 = arith.constant 0 : index
    %c0_4 = arith.constant 0 : index
    %c0_5 = arith.constant 0 : index
    %4 = vector.load %arg4[%c0_3, %c0_4, %c0_5] : memref<2x16x128xf32, #tpu.memory_space<vmem>>, vector<2x16x128xf32>
    "tpu.trace_start"() <{level = 10 : i32, message = "btc,bcs->bts"}> : () -> ()
    %cst = arith.constant dense<0.000000e+00> : vector<2x128x128xf32>
    %5 = tpu.matmul %3, %4, %cst {dimension_numbers = #tpu.dot_dimension_numbers<[2], [1], [1], [2], [0, 0, 0, 1, 1, 2], [0], [0]>} : vector<2x128x16xf32>, vector<2x16x128xf32>, vector<2x128x128xf32> -> vector<2x128x128xf32>
    "tpu.trace_stop"() : () -> ()
    %c1_i32 = arith.constant 1 : i32
    %6 = arith.addi %arg2, %c1_i32 : i32
    %c128_i32 = arith.constant 128 : i32
    %7 = arith.muli %6, %c128_i32 : i32
    %c8_i32 = arith.constant 8 : i32
    %8 = arith.cmpi sgt, %7, %c8_i32 : i32
    %9 = arith.extui %8 : i1 to i32
    %c0_i32_6 = arith.constant 0 : i32
    %10 = arith.cmpi ne, %9, %c0_i32_6 : i32
    %11 = scf.if %10 -> (vector<2x128x128xf32>) {
      %c128_i32_33 = arith.constant 128 : i32
      %39 = arith.muli %arg2, %c128_i32_33 : i32
      %40 = tpu.iota {dimensions = array<i32: 2>} : vector<2x128x128xi32>
      %41 = vector.broadcast %39 : i32 to vector<2x128x128xi32>
      %42 = arith.addi %41, %40 : vector<2x128x128xi32>
      %c8_i32_34 = arith.constant 8 : i32
      %43 = vector.broadcast %c8_i32_34 : i32 to vector<2x128x128xi32>
      %44 = arith.cmpi slt, %42, %43 : vector<2x128x128xi32>
      %cst_35 = arith.constant -1.000000e+30 : f32
      %45 = vector.broadcast %cst_35 : f32 to vector<2x128x128xf32>
      %46 = arith.select %44, %5, %45 : vector<2x128x128xi1>, vector<2x128x128xf32>
      scf.yield %46 : vector<2x128x128xf32>
    } else {
      scf.yield %5 : vector<2x128x128xf32>
    }
    %c0_7 = arith.constant 0 : index
    %c0_8 = arith.constant 0 : index
    %c0_9 = arith.constant 0 : index
    %12 = vector.load %arg7[%c0_7, %c0_8, %c0_9] : memref<2x128x1xf32, #tpu.memory_space<vmem>>, vector<2x128x1xf32>
    %cst_10 = arith.constant dense<0xFF800000> : vector<2x128xf32>
    %13 = vector.multi_reduction <maximumf>, %11, %cst_10 [2] : vector<2x128x128xf32> to vector<2x128xf32>
    %14 = vector.shape_cast %13 : vector<2x128xf32> to vector<2x128x1xf32>
    %15 = arith.maximumf %12, %14 : vector<2x128x1xf32>
    %16 = arith.subf %12, %15 : vector<2x128x1xf32>
    %17 = math.exp %16 : vector<2x128x1xf32>
    %18 = vector.broadcast %15 : vector<2x128x1xf32> to vector<2x128x128xf32>
    %19 = arith.subf %11, %18 : vector<2x128x128xf32>
    %20 = math.exp %19 : vector<2x128x128xf32>
    %c0_11 = arith.constant 0 : index
    %c0_12 = arith.constant 0 : index
    %c0_13 = arith.constant 0 : index
    %21 = vector.load %arg8[%c0_11, %c0_12, %c0_13] : memref<2x128x1xf32, #tpu.memory_space<vmem>>, vector<2x128x1xf32>
    %22 = arith.mulf %17, %21 : vector<2x128x1xf32>
    %cst_14 = arith.constant dense<0.000000e+00> : vector<2x128xf32>
    %23 = vector.multi_reduction <add>, %20, %cst_14 [2] : vector<2x128x128xf32> to vector<2x128xf32>
    %24 = vector.shape_cast %23 : vector<2x128xf32> to vector<2x128x1xf32>
    %25 = arith.addf %22, %24 : vector<2x128x1xf32>
    %c0_15 = arith.constant 0 : index
    %c0_16 = arith.constant 0 : index
    %c0_17 = arith.constant 0 : index
    %26 = vector.load %arg8[%c0_15, %c0_16, %c0_17] : memref<2x128x1xf32, #tpu.memory_space<vmem>>, vector<2x128x1xf32>
    tpu.vector_store %arg8[%c0_15, %c0_16, %c0_17], %25 {strides = array<i32>} : memref<2x128x1xf32, #tpu.memory_space<vmem>>, vector<2x128x1xf32>,
    %c0_18 = arith.constant 0 : index
    %c0_19 = arith.constant 0 : index
    %c0_20 = arith.constant 0 : index
    %27 = vector.load %arg7[%c0_18, %c0_19, %c0_20] : memref<2x128x1xf32, #tpu.memory_space<vmem>>, vector<2x128x1xf32>
    tpu.vector_store %arg7[%c0_18, %c0_19, %c0_20], %15 {strides = array<i32>} : memref<2x128x1xf32, #tpu.memory_space<vmem>>, vector<2x128x1xf32>,
    %c0_21 = arith.constant 0 : index
    %c0_22 = arith.constant 0 : index
    %c0_23 = arith.constant 0 : index
    %28 = vector.load %arg5[%c0_21, %c0_22, %c0_23] : memref<2x16x128xf32, #tpu.memory_space<vmem>>, vector<2x16x128xf32>
    "tpu.trace_start"() <{level = 10 : i32, message = "bcs,bts->bct"}> : () -> ()
    %cst_24 = arith.constant dense<0.000000e+00> : vector<2x16x128xf32>
    %29 = tpu.matmul %28, %20, %cst_24 {dimension_numbers = #tpu.dot_dimension_numbers<[2], [2], [1], [1], [0, 0, 0, 1, 1, 1], [0], [0]>} : vector<2x16x128xf32>, vector<2x128x128xf32>, vector<2x16x128xf32> -> vector<2x16x128xf32>
    "tpu.trace_stop"() : () -> ()
    %30 = tpu.transpose %17, [0, 2, 1] : vector<2x128x1xf32> -> vector<2x1x128xf32>
    %c0_25 = arith.constant 0 : index
    %c0_26 = arith.constant 0 : index
    %c0_27 = arith.constant 0 : index
    %31 = vector.load %arg9[%c0_25, %c0_26, %c0_27] : memref<2x16x128xf32, #tpu.memory_space<vmem>>, vector<2x16x128xf32>
    %32 = vector.broadcast %30 : vector<2x1x128xf32> to vector<2x16x128xf32>
    %33 = arith.mulf %32, %31 : vector<2x16x128xf32>
    %34 = arith.addf %33, %29 : vector<2x16x128xf32>
    %c0_28 = arith.constant 0 : index
    %c0_29 = arith.constant 0 : index
    %c0_30 = arith.constant 0 : index
    %35 = vector.load %arg9[%c0_28, %c0_29, %c0_30] : memref<2x16x128xf32, #tpu.memory_space<vmem>>, vector<2x16x128xf32>
    tpu.vector_store %arg9[%c0_28, %c0_29, %c0_30], %34 {strides = array<i32>} : memref<2x16x128xf32, #tpu.memory_space<vmem>>, vector<2x16x128xf32>,
    %c0_i32_31 = arith.constant 0 : i32
    %36 = arith.cmpi eq, %arg2, %c0_i32_31 : i32
    %37 = arith.extui %36 : i1 to i32
    %c0_i32_32 = arith.constant 0 : i32
    %38 = arith.cmpi ne, %37, %c0_i32_32 : i32
    scf.if %38 {
      %c0_33 = arith.constant 0 : index
      %c0_34 = arith.constant 0 : index
      %c0_35 = arith.constant 0 : index
      %39 = vector.load %arg8[%c0_33, %c0_34, %c0_35] : memref<2x128x1xf32, #tpu.memory_space<vmem>>, vector<2x128x1xf32>
      %40 = tpu.reciprocal %39 : vector<2x128x1xf32> -> vector<2x128x1xf32>
      %41 = tpu.transpose %40, [0, 2, 1] : vector<2x128x1xf32> -> vector<2x1x128xf32>
      %c0_36 = arith.constant 0 : index
      %c0_37 = arith.constant 0 : index
      %c0_38 = arith.constant 0 : index
      %42 = vector.load %arg9[%c0_36, %c0_37, %c0_38] : memref<2x16x128xf32, #tpu.memory_space<vmem>>, vector<2x16x128xf32>
      %43 = vector.broadcast %41 : vector<2x1x128xf32> to vector<2x16x128xf32>
      %44 = arith.mulf %42, %43 : vector<2x16x128xf32>
      %c0_39 = arith.constant 0 : index
      %c0_40 = arith.constant 0 : index
      %c0_41 = arith.constant 0 : index
      %45 = vector.load %arg6[%c0_39, %c0_40, %c0_41] : memref<2x16x128xf32, #tpu.memory_space<vmem>>, vector<2x16x128xf32>
      tpu.vector_store %arg6[%c0_39, %c0_40, %c0_41], %44 {strides = array<i32>} : memref<2x16x128xf32, #tpu.memory_space<vmem>>, vector<2x16x128xf32>,
    } else {
    }
    return
  }
  func.func @transform_0(%arg0: i32, %arg1: i32, %arg2: i32) -> (i32, i32, i32) {
    %c0_i32 = arith.constant 0 : i32
    %c0_i32_0 = arith.constant 0 : i32
    return %arg0, %arg1, %c0_i32 : i32, i32, i32
  }
  func.func @transform_1(%arg0: i32, %arg1: i32, %arg2: i32) -> (i32, i32, i32) {
    %c0_i32 = arith.constant 0 : i32
    %c0_i32_0 = arith.constant 0 : i32
    return %arg0, %c0_i32, %arg2 : i32, i32, i32
  }
  func.func @transform_2(%arg0: i32, %arg1: i32, %arg2: i32) -> (i32, i32, i32) {
    %c0_i32 = arith.constant 0 : i32
    %c0_i32_0 = arith.constant 0 : i32
    return %arg0, %c0_i32, %arg2 : i32, i32, i32
  }
  func.func @transform_3(%arg0: i32, %arg1: i32, %arg2: i32) -> (i32, i32, i32) {
    %c0_i32 = arith.constant 0 : i32
    %c0_i32_0 = arith.constant 0 : i32
    return %arg0, %c0_i32, %arg1 : i32, i32, i32
  }
}

</mosaic_0001>

<llo_original>
// kernel: tpu_custom_call.1
$region0: #{tpu_custom_call.1}
  #allocation0 [shape = 'u32[]', space=smem, size = 0x4, offset = 0x4, fixed_abs, tag = 'smem constant byte address 0x4 - core index']
  #allocation1 [shape = 'u32[144,128]{1,0:T(1,128)}', space=vmem, size = 0x12000, scoped, tag = 'internal scratch']
  #allocation2 [shape = 'f32[2,128,1]{2,1,0:T(8,128)}', space=vmem, size = 0x20000, scoped, tag = 'scratch operand']
  #allocation3 [shape = 'f32[2,128,1]{2,1,0:T(8,128)}', space=vmem, size = 0x20000, scoped, tag = 'scratch operand']
  #allocation4 [shape = 'f32[2,16,128]{2,1,0:T(8,128)}', space=vmem, size = 0x4000, scoped, tag = 'scratch operand']
  %s0 = inlined_call_operand.vmem [shape: f32[4,128,16], index: 0, kind: input, shape index: {}]
  %s1 = inlined_call_operand.vmem [shape: f32[4,16,128], index: 1, kind: input, shape index: {}]
  %s2 = inlined_call_operand.vmem [shape: f32[4,16,128], index: 2, kind: input, shape index: {}]
  %s3 = inlined_call_operand.hbm [shape: f32[4,16,128], index: 3, kind: output, shape index: {}]
  %s4 = sld [smem:[#allocation0]]
  $region61: #{tpu_custom_call.1} parent=0
    _
  %s6 = ssub.s32 1, %s4
  %s7 = scalar_select 0, %s6, %s4
  $region1: #{tpu_custom_call.1} parent=0
    #allocation5 [shape = 'u8[32768]{0}', space=vmem, size = 0x8000, scoped, tag = 'output window, operand 0']
    #allocation6 [shape = 's32[2]{0}', space=sflag, size = 0x8, scoped, tag = 'scoped memory for tpu_custom_call.1']
    %8 = vsyncpa [#allocation6], 0
    %s9 = scalar_lea.sflag [#allocation6], 1
    %10 = vsyncpa %s9, 0
    loop: start=0, step=1, limit=4
    $region2: #{tpu_custom_call.1} parent=1 // loop_pre_header
      _
    $region3: #{tpu_custom_call.1} parent=1 // loop_header
      %s12 = sphi 0, %s16
      %p13 = scmp.ge.s32.totalorder %s12, 4
      %s19 = sphi 0, %s38
      %s20 = sphi 0, %s34
      %s21 = sphi 0, %s30
      %s22 = sphi 0, %s19
      %s23 = sphi 0, %s20
      %s24 = sphi 0, %s21
      %s25 = sphi 0, %s22
      %s26 = sphi 0, %s23
      %s27 = sphi 0, %s24
      %s43 = sphi 0, %s45
      %s46 = sphi 0, %s43
      %s47 = sphi 0, %s46
      %s63 = sphi 0, %s47
      %s71 = sphi 0, %s73
      %s74 = sphi 0, %s71
      %s75 = sphi 0, %s74
      %s91 = sphi 0, %s75
      %s99 = sphi 0, %s101
      %s102 = sphi 0, %s99
      %s103 = sphi 0, %s102
      %s119 = sphi 0, %s103
      %s127 = sphi 0, %s129
      %s130 = sphi 0, %s127
      %s131 = sphi 0, %s130
      %s147 = sphi 0, %s131
    $region4: #{tpu_custom_call.1} parent=1 // loop_header_branch
      %15 = sbr.rel (%p13) target = $region8
    $region5: #{tpu_custom_call.1} parent=1 // loop_body
      %s17 = ssub.s32 %s12, 1
      %s18 = ssub.s32 %s12, 2
      %s28 = sadd.s32 1, %s21
      %p29 = scmp.ge.s32.totalorder %s28, 1
      %s30 = scalar_select %p29, 0, %s28
      %s31 = sadd.s32 1, %s20
      %s32 = scalar_select %p29, %s31, %s20
      %p33 = scmp.ge.s32.totalorder %s32, 1
      %s34 = scalar_select %p33, 0, %s32
      %s35 = sadd.s32 1, %s19
      %s36 = scalar_select %p33, %s35, %s19
      %p37 = scmp.ge.s32.totalorder %s36, 2
      %s38 = scalar_select %p37, 0, %s36
      %s39 = ssub.s32 %s19, %s38
      %s40 = ssub.s32 %s20, %s34
      %s41 = sor.u32 %s39, %s40
      %p42 = scmp.eq.s32.totalorder %s41, 0
      %s44 = sadd.s32 %s43, 1
      %s45 = scalar_select %p42, %s43, %s44
      %p48 = pneg %p42
      %p49 = scmp.eq.s32.totalorder %s12, 1
      %p50 = por %p48, %p49
      %p51 = scmp.ne.s32.totalorder %s43, %s46
      %p52 = scmp.eq.s32.totalorder %s12, 0
      %p53 = por %p51, %p52
      %p54 = scmp.ne.s32.totalorder %s43, %s46
      %p55 = scmp.eq.s32.totalorder %s17, 1
      %p56 = por %p54, %p55
      %p57 = scmp.ne.s32.totalorder %s46, %s47
      %p58 = scmp.eq.s32.totalorder %s17, 0
      %p59 = por %p57, %p58
      %p60 = scmp.ne.s32.totalorder %s46, %s47
      %p61 = scmp.eq.s32.totalorder %s18, 1
      %p62 = por %p60, %p61
      %p64 = scmp.ne.s32.totalorder %s47, %s63
      %p65 = scmp.eq.s32.totalorder %s18, 0
      %p66 = por %p64, %p65
      %s67 = ssub.s32 %s19, %s38
      %s68 = ssub.s32 %s21, %s30
      %s69 = sor.u32 %s67, %s68
      %p70 = scmp.eq.s32.totalorder %s69, 0
      %s72 = sadd.s32 %s71, 1
      %s73 = scalar_select %p70, %s71, %s72
      %p76 = pneg %p70
      %p77 = scmp.eq.s32.totalorder %s12, 1
      %p78 = por %p76, %p77
      %p79 = scmp.ne.s32.totalorder %s71, %s74
      %p80 = scmp.eq.s32.totalorder %s12, 0
      %p81 = por %p79, %p80
      %p82 = scmp.ne.s32.totalorder %s71, %s74
      %p83 = scmp.eq.s32.totalorder %s17, 1
      %p84 = por %p82, %p83
      %p85 = scmp.ne.s32.totalorder %s74, %s75
      %p86 = scmp.eq.s32.totalorder %s17, 0
      %p87 = por %p85, %p86
      %p88 = scmp.ne.s32.totalorder %s74, %s75
      %p89 = scmp.eq.s32.totalorder %s18, 1
      %p90 = por %p88, %p89
      %p92 = scmp.ne.s32.totalorder %s75, %s91
      %p93 = scmp.eq.s32.totalorder %s18, 0
      %p94 = por %p92, %p93
      %s95 = ssub.s32 %s19, %s38
      %s96 = ssub.s32 %s21, %s30
      %s97 = sor.u32 %s95, %s96
      %p98 = scmp.eq.s32.totalorder %s97, 0
      %s100 = sadd.s32 %s99, 1
      %s101 = scalar_select %p98, %s99, %s100
      %p104 = pneg %p98
      %p105 = scmp.eq.s32.totalorder %s12, 1
      %p106 = por %p104, %p105
      %p107 = scmp.ne.s32.totalorder %s99, %s102
      %p108 = scmp.eq.s32.totalorder %s12, 0
      %p109 = por %p107, %p108
      %p110 = scmp.ne.s32.totalorder %s99, %s102
      %p111 = scmp.eq.s32.totalorder %s17, 1
      %p112 = por %p110, %p111
      %p113 = scmp.ne.s32.totalorder %s102, %s103
      %p114 = scmp.eq.s32.totalorder %s17, 0
      %p115 = por %p113, %p114
      %p116 = scmp.ne.s32.totalorder %s102, %s103
      %p117 = scmp.eq.s32.totalorder %s18, 1
      %p118 = por %p116, %p117
      %p120 = scmp.ne.s32.totalorder %s103, %s119
      %p121 = scmp.eq.s32.totalorder %s18, 0
      %p122 = por %p120, %p121
      %s123 = ssub.s32 %s19, %s38
      %s124 = ssub.s32 %s20, %s34
      %s125 = sor.u32 %s123, %s124
      %p126 = scmp.eq.s32.totalorder %s125, 0
      %s128 = sadd.s32 %s127, 1
      %s129 = scalar_select %p126, %s127, %s128
      %p132 = pneg %p126
      %p133 = scmp.eq.s32.totalorder %s12, 1
      %p134 = por %p132, %p133
      %p135 = scmp.ne.s32.totalorder %s127, %s130
      %p136 = scmp.eq.s32.totalorder %s12, 0
      %p137 = por %p135, %p136
      %p138 = scmp.ne.s32.totalorder %s127, %s130
      %p139 = scmp.eq.s32.totalorder %s17, 1
      %p140 = por %p138, %p139
      %p141 = scmp.ne.s32.totalorder %s130, %s131
      %p142 = scmp.eq.s32.totalorder %s17, 0
      %p143 = por %p141, %p142
      %p144 = scmp.ne.s32.totalorder %s130, %s131
      %p145 = scmp.eq.s32.totalorder %s18, 1
      %p146 = por %p144, %p145
      %p148 = scmp.ne.s32.totalorder %s131, %s147
      %p149 = scmp.eq.s32.totalorder %s18, 0
      %p150 = por %p148, %p149
      %p151 = scmp.le.s32.totalorder 1, %s12
      %p152 = scmp.lt.s32.totalorder %s12, 3
      %p153 = pnand %p151, %p152
      %p154 = pneg %p153
      // Predicated region
      $region9: #{tpu_custom_call.1} parent=5 // pred_check
        _
      $region10: #{tpu_custom_call.1} parent=5 // pred_check_branch
        %156 = sbr.rel (%p153) target = $region12
      $region11: #{tpu_custom_call.1} parent=5 // pred_region
        %s157 = ssub.s32 %s12, 1
      $region12: #{tpu_custom_call.1} parent=5 // pred_fallthru
        _
      %p158 = scmp.lt.s32.totalorder %s12, 2
      // Predicated region
      $region13: #{tpu_custom_call.1} parent=5 // pred_check
        %p159 = pneg %p158
      $region14: #{tpu_custom_call.1} parent=5 // pred_check_branch
        %161 = sbr.rel (%p159) target = $region16
      $region15: #{tpu_custom_call.1} parent=5 // pred_region
        // Predicated region
        $region17: #{tpu_custom_call.1} parent=15 // pred_check
          %p162 = pneg %p53
        $region18: #{tpu_custom_call.1} parent=15 // pred_check_branch
          %164 = sbr.rel (%p162) target = $region20
        $region19: #{tpu_custom_call.1} parent=15 // pred_region
          %s165 = smul.u32 2, %s19
          %s166 = smul.u32 16, %s20
          %p167 = scmp.lt.s32.totalorder %s165, 3
          %s168 = scalar_select %p167, %s165, 3
          %p169 = scmp.lt.s32.totalorder %s166, 15
          %s170 = scalar_select %p169, %s166, 15
          %s171 = smul.addr %s168, 16
          %s172 = sadd.s32 %s170, %s171
          %s173 = smul.addr %s172, 8
          %s174 = scalar_lea.vmem %s0, %s173
          %s175 = smul.u32 2, %s19
          %s176 = smul.u32 16, %s20
        $region20: #{tpu_custom_call.1} parent=15 // pred_fallthru
          _
        // Predicated region
        $region21: #{tpu_custom_call.1} parent=15 // pred_check
          %p177 = pneg %p81
        $region22: #{tpu_custom_call.1} parent=15 // pred_check_branch
          %179 = sbr.rel (%p177) target = $region24
        $region23: #{tpu_custom_call.1} parent=15 // pred_region
          %s180 = smul.u32 2, %s19
          %p181 = scmp.lt.s32.totalorder %s180, 3
          %s182 = scalar_select %p181, %s180, 3
          %p183 = scmp.lt.s32.totalorder %s21, 0
          %s184 = scalar_select %p183, %s21, 0
          %s185 = smul.addr %s182, 2
          %s186 = sadd.s32 %s184, %s185
          %s187 = smul.addr %s186, 8
          %s188 = scalar_lea.vmem %s1, %s187
          %s189 = smul.u32 2, %s19
        $region24: #{tpu_custom_call.1} parent=15 // pred_fallthru
          _
        // Predicated region
        $region25: #{tpu_custom_call.1} parent=15 // pred_check
          %p190 = pneg %p109
        $region26: #{tpu_custom_call.1} parent=15 // pred_check_branch
          %192 = sbr.rel (%p190) target = $region28
        $region27: #{tpu_custom_call.1} parent=15 // pred_region
          %s193 = smul.u32 2, %s19
          %p194 = scmp.lt.s32.totalorder %s193, 3
          %s195 = scalar_select %p194, %s193, 3
          %p196 = scmp.lt.s32.totalorder %s21, 0
          %s197 = scalar_select %p196, %s21, 0
          %s198 = smul.addr %s195, 2
          %s199 = sadd.s32 %s197, %s198
          %s200 = smul.addr %s199, 8
          %s201 = scalar_lea.vmem %s2, %s200
          %s202 = smul.u32 2, %s19
        $region28: #{tpu_custom_call.1} parent=15 // pred_fallthru
          _
      $region16: #{tpu_custom_call.1} parent=5 // pred_fallthru
        _
      %p203 = scmp.le.s32.totalorder 1, %s12
      %p204 = scmp.lt.s32.totalorder %s12, 3
      %p205 = pnand %p203, %p204
      %p206 = pneg %p205
      // Predicated region
      $region29: #{tpu_custom_call.1} parent=5 // pred_check
        _
      $region30: #{tpu_custom_call.1} parent=5 // pred_check_branch
        %208 = sbr.rel (%p205) target = $region32
      $region31: #{tpu_custom_call.1} parent=5 // pred_region
        %s209 = ssub.s32 %s12, 1
        %s210 = smul.u32 2, %s22
        %s211 = smul.u32 16, %s23
        %p212 = scmp.lt.s32.totalorder %s210, 3
        %s213 = scalar_select %p212, %s210, 3
        %p214 = scmp.lt.s32.totalorder %s211, 15
        %s215 = scalar_select %p214, %s211, 15
        %s216 = smul.addr %s213, 16
        %s217 = sadd.s32 %s215, %s216
        %s218 = smul.addr %s217, 8
        %s219 = scalar_lea.vmem %s0, %s218
        %p220 = pneg %p59
        %p221 = pneg %p56
        %s222 = smul.u32 2, %s22
        %p223 = scmp.lt.s32.totalorder %s222, 3
        %s224 = scalar_select %p223, %s222, 3
        %p225 = scmp.lt.s32.totalorder %s24, 0
        %s226 = scalar_select %p225, %s24, 0
        %s227 = smul.addr %s224, 2
        %s228 = sadd.s32 %s226, %s227
        %s229 = smul.addr %s228, 8
        %s230 = scalar_lea.vmem %s1, %s229
        %p231 = pneg %p87
        %p232 = pneg %p84
        %s233 = smul.u32 2, %s22
        %p234 = scmp.lt.s32.totalorder %s233, 3
        %s235 = scalar_select %p234, %s233, 3
        %p236 = scmp.lt.s32.totalorder %s24, 0
        %s237 = scalar_select %p236, %s24, 0
        %s238 = smul.addr %s235, 2
        %s239 = sadd.s32 %s237, %s238
        %s240 = smul.addr %s239, 8
        %s241 = scalar_lea.vmem %s2, %s240
        %p242 = pneg %p115
        %p243 = pneg %p112
        %p244 = pneg %p143
        %p245 = pneg %p140
        %s246 = sand.u32 %s130, 1
        %s247 = scalar_lea.sflag [#allocation6], %s246
        %s248 = sand.u32 %s130, 1
        %s249 = smul.addr %s248, 32
        %s250 = scalar_lea.vmem [#allocation5], %s249
        %s251 = smul.u32 2, %s22
        %s252 = smul.u32 16, %s23
        %p253 = scmp.lt.s32.totalorder %s251, 3
        %s254 = scalar_select %p253, %s251, 3
        %p255 = scmp.lt.s32.totalorder %s252, 15
        %s256 = scalar_select %p255, %s252, 15
        %s257 = smul.addr %s254, 16
        %s258 = sadd.s32 %s256, %s257
        %s259 = smul.addr %s258, 8
        %s260 = scalar_lea.vmem %s0, %s259
        %s261 = smul.u32 2, %s22
        %s262 = smul.u32 16, %s23
        %s263 = smul.u32 2, %s22
        %p264 = scmp.lt.s32.totalorder %s263, 3
        %s265 = scalar_select %p264, %s263, 3
        %p266 = scmp.lt.s32.totalorder %s24, 0
        %s267 = scalar_select %p266, %s24, 0
        %s268 = smul.addr %s265, 2
        %s269 = sadd.s32 %s267, %s268
        %s270 = smul.addr %s269, 8
        %s271 = scalar_lea.vmem %s1, %s270
        %s272 = smul.u32 2, %s22
        %s273 = smul.u32 2, %s22
        %p274 = scmp.lt.s32.totalorder %s273, 3
        %s275 = scalar_select %p274, %s273, 3
        %p276 = scmp.lt.s32.totalorder %s24, 0
        %s277 = scalar_select %p276, %s24, 0
        %s278 = smul.addr %s275, 2
        %s279 = sadd.s32 %s277, %s278
        %s280 = smul.addr %s279, 8
        %s281 = scalar_lea.vmem %s2, %s280
        %s282 = smul.u32 2, %s22
        %s283 = smul.u32 2, %s22
        %p284 = scmp.eq.s32.totalorder %s24, 0
        // Predicated region
        $region33: #{tpu_custom_call.1} parent=31 // pred_check
          %p285 = pneg %p284
        $region34: #{tpu_custom_call.1} parent=31 // pred_check_branch
          %287 = sbr.rel (%p285) target = $region36
        $region35: #{tpu_custom_call.1} parent=31 // pred_region
          %vm288 = vcmask 7168
          %289 = vst.msk [vmem:[#allocation2] sm:$0xff] %vm288, -inf
          %290 = vst.msk [vmem:[#allocation2 + $0x8] sm:$0xff] %vm288, -inf
          %291 = vst.msk [vmem:[#allocation2 + $0x10] sm:$0xff] %vm288, -inf
          %292 = vst.msk [vmem:[#allocation2 + $0x18] sm:$0xff] %vm288, -inf
          %293 = vst.msk [vmem:[#allocation2 + $0x20] sm:$0xff] %vm288, -inf
          %294 = vst.msk [vmem:[#allocation2 + $0x28] sm:$0xff] %vm288, -inf
          %295 = vst.msk [vmem:[#allocation2 + $0x30] sm:$0xff] %vm288, -inf
          %296 = vst.msk [vmem:[#allocation2 + $0x38] sm:$0xff] %vm288, -inf
          %297 = vst.msk [vmem:[#allocation2 + $0x40] sm:$0xff] %vm288, -inf
          %298 = vst.msk [vmem:[#allocation2 + $0x48] sm:$0xff] %vm288, -inf
          %299 = vst.msk [vmem:[#allocation2 + $0x50] sm:$0xff] %vm288, -inf
          %300 = vst.msk [vmem:[#allocation2 + $0x58] sm:$0xff] %vm288, -inf
          %301 = vst.msk [vmem:[#allocation2 + $0x60] sm:$0xff] %vm288, -inf
          %302 = vst.msk [vmem:[#allocation2 + $0x68] sm:$0xff] %vm288, -inf
          %303 = vst.msk [vmem:[#allocation2 + $0x70] sm:$0xff] %vm288, -inf
          %304 = vst.msk [vmem:[#allocation2 + $0x78] sm:$0xff] %vm288, -inf
          %305 = vst.msk [vmem:[#allocation2 + $0x80] sm:$0xff] %vm288, -inf
          %306 = vst.msk [vmem:[#allocation2 + $0x88] sm:$0xff] %vm288, -inf
          %307 = vst.msk [vmem:[#allocation2 + $0x90] sm:$0xff] %vm288, -inf
          %308 = vst.msk [vmem:[#allocation2 + $0x98] sm:$0xff] %vm288, -inf
          %309 = vst.msk [vmem:[#allocation2 + $0xa0] sm:$0xff] %vm288, -inf
          %310 = vst.msk [vmem:[#allocation2 + $0xa8] sm:$0xff] %vm288, -inf
          %311 = vst.msk [vmem:[#allocation2 + $0xb0] sm:$0xff] %vm288, -inf
          %312 = vst.msk [vmem:[#allocation2 + $0xb8] sm:$0xff] %vm288, -inf
          %313 = vst.msk [vmem:[#allocation2 + $0xc0] sm:$0xff] %vm288, -inf
          %314 = vst.msk [vmem:[#allocation2 + $0xc8] sm:$0xff] %vm288, -inf
          %315 = vst.msk [vmem:[#allocation2 + $0xd0] sm:$0xff] %vm288, -inf
          %316 = vst.msk [vmem:[#allocation2 + $0xd8] sm:$0xff] %vm288, -inf
          %317 = vst.msk [vmem:[#allocation2 + $0xe0] sm:$0xff] %vm288, -inf
          %318 = vst.msk [vmem:[#allocation2 + $0xe8] sm:$0xff] %vm288, -inf
          %319 = vst.msk [vmem:[#allocation2 + $0xf0] sm:$0xff] %vm288, -inf
          %320 = vst.msk [vmem:[#allocation2 + $0xf8] sm:$0xff] %vm288, -inf
          %321 = vst.msk [vmem:[#allocation3] sm:$0xff] %vm288, 0.0
          %322 = vst.msk [vmem:[#allocation3 + $0x8] sm:$0xff] %vm288, 0.0
          %323 = vst.msk [vmem:[#allocation3 + $0x10] sm:$0xff] %vm288, 0.0
          %324 = vst.msk [vmem:[#allocation3 + $0x18] sm:$0xff] %vm288, 0.0
          %325 = vst.msk [vmem:[#allocation3 + $0x20] sm:$0xff] %vm288, 0.0
          %326 = vst.msk [vmem:[#allocation3 + $0x28] sm:$0xff] %vm288, 0.0
          %327 = vst.msk [vmem:[#allocation3 + $0x30] sm:$0xff] %vm288, 0.0
          %328 = vst.msk [vmem:[#allocation3 + $0x38] sm:$0xff] %vm288, 0.0
          %329 = vst.msk [vmem:[#allocation3 + $0x40] sm:$0xff] %vm288, 0.0
          %330 = vst.msk [vmem:[#allocation3 + $0x48] sm:$0xff] %vm288, 0.0
          %331 = vst.msk [vmem:[#allocation3 + $0x50] sm:$0xff] %vm288, 0.0
          %332 = vst.msk [vmem:[#allocation3 + $0x58] sm:$0xff] %vm288, 0.0
          %333 = vst.msk [vmem:[#allocation3 + $0x60] sm:$0xff] %vm288, 0.0
          %334 = vst.msk [vmem:[#allocation3 + $0x68] sm:$0xff] %vm288, 0.0
          %335 = vst.msk [vmem:[#allocation3 + $0x70] sm:$0xff] %vm288, 0.0
          %336 = vst.msk [vmem:[#allocation3 + $0x78] sm:$0xff] %vm288, 0.0
          %337 = vst.msk [vmem:[#allocation3 + $0x80] sm:$0xff] %vm288, 0.0
          %338 = vst.msk [vmem:[#allocation3 + $0x88] sm:$0xff] %vm288, 0.0
          %339 = vst.msk [vmem:[#allocation3 + $0x90] sm:$0xff] %vm288, 0.0
          %340 = vst.msk [vmem:[#allocation3 + $0x98] sm:$0xff] %vm288, 0.0
          %341 = vst.msk [vmem:[#allocation3 + $0xa0] sm:$0xff] %vm288, 0.0
          %342 = vst.msk [vmem:[#allocation3 + $0xa8] sm:$0xff] %vm288, 0.0
          %343 = vst.msk [vmem:[#allocation3 + $0xb0] sm:$0xff] %vm288, 0.0
          %344 = vst.msk [vmem:[#allocation3 + $0xb8] sm:$0xff] %vm288, 0.0
          %345 = vst.msk [vmem:[#allocation3 + $0xc0] sm:$0xff] %vm288, 0.0
          %346 = vst.msk [vmem:[#allocation3 + $0xc8] sm:$0xff] %vm288, 0.0
          %347 = vst.msk [vmem:[#allocation3 + $0xd0] sm:$0xff] %vm288, 0.0
          %348 = vst.msk [vmem:[#allocation3 + $0xd8] sm:$0xff] %vm288, 0.0
          %349 = vst.msk [vmem:[#allocation3 + $0xe0] sm:$0xff] %vm288, 0.0
          %350 = vst.msk [vmem:[#allocation3 + $0xe8] sm:$0xff] %vm288, 0.0
          %351 = vst.msk [vmem:[#allocation3 + $0xf0] sm:$0xff] %vm288, 0.0
          %352 = vst.msk [vmem:[#allocation3 + $0xf8] sm:$0xff] %vm288, 0.0
          %353 = vst [vmem:[#allocation4] sm:$0xff] 0.0
          %354 = vst [vmem:[#allocation4 + $0x8] sm:$0xff] 0.0
          %355 = vst [vmem:[#allocation4 + $0x10] sm:$0xff] 0.0
          %356 = vst [vmem:[#allocation4 + $0x18] sm:$0xff] 0.0
        $region36: #{tpu_custom_call.1} parent=31 // pred_fallthru
          _
        %v357 = vld [vmem:[%s260] sm:$0xff]
        %v358 = vld [vmem:[%s260 + $0x8] sm:$0xff]
        %v359 = vld [vmem:[%s260 + $0x10] sm:$0xff]
        %v360 = vld [vmem:[%s260 + $0x18] sm:$0xff]
        %v361 = vld [vmem:[%s260 + $0x20] sm:$0xff]
        %v362 = vld [vmem:[%s260 + $0x28] sm:$0xff]
        %v363 = vld [vmem:[%s260 + $0x30] sm:$0xff]
        %v364 = vld [vmem:[%s260 + $0x38] sm:$0xff]
        %v365 = vld [vmem:[%s260 + $0x40] sm:$0xff]
        %v366 = vld [vmem:[%s260 + $0x48] sm:$0xff]
        %v367 = vld [vmem:[%s260 + $0x50] sm:$0xff]
        %v368 = vld [vmem:[%s260 + $0x58] sm:$0xff]
        %v369 = vld [vmem:[%s260 + $0x60] sm:$0xff]
        %v370 = vld [vmem:[%s260 + $0x68] sm:$0xff]
        %v371 = vld [vmem:[%s260 + $0x70] sm:$0xff]
        %v372 = vld [vmem:[%s260 + $0x78] sm:$0xff]
        %v373 = vld [vmem:[%s260 + $0x80] sm:$0xff]
        %v374 = vld [vmem:[%s260 + $0x88] sm:$0xff]
        %v375 = vld [vmem:[%s260 + $0x90] sm:$0xff]
        %v376 = vld [vmem:[%s260 + $0x98] sm:$0xff]
        %v377 = vld [vmem:[%s260 + $0xa0] sm:$0xff]
        %v378 = vld [vmem:[%s260 + $0xa8] sm:$0xff]
        %v379 = vld [vmem:[%s260 + $0xb0] sm:$0xff]
        %v380 = vld [vmem:[%s260 + $0xb8] sm:$0xff]
        %v381 = vld [vmem:[%s260 + $0xc0] sm:$0xff]
        %v382 = vld [vmem:[%s260 + $0xc8] sm:$0xff]
        %v383 = vld [vmem:[%s260 + $0xd0] sm:$0xff]
        %v384 = vld [vmem:[%s260 + $0xd8] sm:$0xff]
        %v385 = vld [vmem:[%s260 + $0xe0] sm:$0xff]
        %v386 = vld [vmem:[%s260 + $0xe8] sm:$0xff]
        %v387 = vld [vmem:[%s260 + $0xf0] sm:$0xff]
        %v388 = vld [vmem:[%s260 + $0xf8] sm:$0xff]
        %v389 = vld [vmem:[%s271] sm:$0xff]
        %v390 = vld [vmem:[%s271 + $0x8] sm:$0xff]
        %v391 = vld [vmem:[%s271 + $0x10] sm:$0xff]
        %v392 = vld [vmem:[%s271 + $0x18] sm:$0xff]
        %vm393 = vcmask 130048
        %v395 = vsel %vm393, %v357, 0
        %v398 = vsel %vm393, %v358, 0
        %v401 = vsel %vm393, %v359, 0
        %v404 = vsel %vm393, %v360, 0
        %v407 = vsel %vm393, %v361, 0
        %v410 = vsel %vm393, %v362, 0
        %v413 = vsel %vm393, %v363, 0
        %v416 = vsel %vm393, %v364, 0
        %v419 = vsel %vm393, %v365, 0
        %v422 = vsel %vm393, %v366, 0
        %v425 = vsel %vm393, %v367, 0
        %v428 = vsel %vm393, %v368, 0
        %v431 = vsel %vm393, %v369, 0
        %v434 = vsel %vm393, %v370, 0
        %v437 = vsel %vm393, %v371, 0
        %v440 = vsel %vm393, %v372, 0
        %442 = vmatprep.subr.mxu0 0.0
        %443 = vmatpush1.msra.mxu0 %v389
        %444 = vmatprep.subr.mxu0 0.0
        %445 = vmatpush1.msra.mxu0 %v390
        %446 = vmatprep.subr.mxu0 0.0
        %447 = vmatpush1.msra.mxu0 0.0
        %448 = vmatprep.subr.mxu0 0.0
        %449 = vmatpush1.msra.mxu0 0.0
        %450 = vmatprep.subr.mxu0 0.0
        %451 = vmatpush1.msra.mxu0 0.0
        %452 = vmatprep.subr.mxu0 0.0
        %453 = vmatpush1.msra.mxu0 0.0
        %454 = vmatprep.subr.mxu0 0.0
        %455 = vmatpush1.msra.mxu0 0.0
        %456 = vmatprep.subr.mxu0 0.0
        %457 = vmatpush1.msra.mxu0 0.0
        %458 = vmatprep.subr.mxu0 0.0
        %459 = vmatpush1.msra.mxu0 0.0
        %460 = vmatprep.subr.mxu0 0.0
        %461 = vmatpush1.msra.mxu0 0.0
        %462 = vmatprep.subr.mxu0 0.0
        %463 = vmatpush1.msra.mxu0 0.0
        %464 = vmatprep.subr.mxu0 0.0
        %465 = vmatpush1.msra.mxu0 0.0
        %466 = vmatprep.subr.mxu0 0.0
        %467 = vmatpush1.msra.mxu0 0.0
        %468 = vmatprep.subr.mxu0 0.0
        %469 = vmatpush1.msra.mxu0 0.0
        %470 = vmatprep.subr.mxu0 0.0
        %471 = vmatpush1.msra.mxu0 0.0
        %472 = vmatprep.subr.mxu0 0.0
        %473 = vmatpush1.msra.mxu0 0.0
        %474 = vmatprep.subr.mxu0 0.0
        %475 = vmatpush1.msra.mxu0 0.0
        %476 = vmatprep.subr.mxu0 0.0
        %477 = vmatpush1.msra.mxu0 0.0
        %478 = vmatprep.subr.mxu0 0.0
        %479 = vmatpush1.msra.mxu0 0.0
        %480 = vmatprep.subr.mxu0 0.0
        %481 = vmatpush1.msra.mxu0 0.0
        %482 = vmatprep.subr.mxu0 0.0
        %483 = vmatpush1.msra.mxu0 0.0
        %484 = vmatprep.subr.mxu0 0.0
        %485 = vmatpush1.msra.mxu0 0.0
        %486 = vmatprep.subr.mxu0 0.0
        %487 = vmatpush1.msra.mxu0 0.0
        %488 = vmatprep.subr.mxu0 0.0
        %489 = vmatpush1.msra.mxu0 0.0
        %490 = vmatprep.subr.mxu0 0.0
        %491 = vmatpush1.msra.mxu0 0.0
        %492 = vmatprep.subr.mxu0 0.0
        %493 = vmatpush1.msra.mxu0 0.0
        %494 = vmatprep.subr.mxu0 0.0
        %495 = vmatpush1.msra.mxu0 0.0
        %496 = vmatprep.subr.mxu0 0.0
        %497 = vmatpush1.msra.mxu0 0.0
        %498 = vmatprep.subr.mxu0 0.0
        %499 = vmatpush1.msra.mxu0 0.0
        %500 = vmatprep.subr.mxu0 0.0
        %501 = vmatpush1.msra.mxu0 0.0
        %502 = vmatprep.subr.mxu0 0.0
        %503 = vmatpush1.msra.mxu0 0.0
        %504 = vmatprep.subr.mxu0 0.0
        %505 = vmatpush1.msra.mxu0 0.0
        %506 = vmatprep.mubr.f32.mxu0 0.0
        %507 = vmatmul.mubr.f32.gmra.mrb[0].mxu0 %v395
        %v508 = vpop.f32.mrb[0].mxu0
        %v509 = vadd.f32 0.0, %v508
        %v510 = vpop.f32.mrb[0].mxu0
        %511 = vmatprep.mubr.f32.mxu0 0.0
        %512 = vmatmul.mubr.f32.gmra.mrb[0].mxu0 %v398
        %v513 = vpop.f32.mrb[0].mxu0
        %v514 = vadd.f32 0.0, %v513
        %v515 = vpop.f32.mrb[0].mxu0
        %516 = vmatprep.mubr.f32.mxu0 0.0
        %517 = vmatmul.mubr.f32.gmra.mrb[0].mxu0 %v401
        %v518 = vpop.f32.mrb[0].mxu0
        %v519 = vadd.f32 0.0, %v518
        %v520 = vpop.f32.mrb[0].mxu0
        %521 = vmatprep.mubr.f32.mxu0 0.0
        %522 = vmatmul.mubr.f32.gmra.mrb[0].mxu0 %v404
        %v523 = vpop.f32.mrb[0].mxu0
        %v524 = vadd.f32 0.0, %v523
        %v525 = vpop.f32.mrb[0].mxu0
        %526 = vmatprep.mubr.f32.mxu0 0.0
        %527 = vmatmul.mubr.f32.gmra.mrb[0].mxu0 %v407
        %v528 = vpop.f32.mrb[0].mxu0
        %v529 = vadd.f32 0.0, %v528
        %v530 = vpop.f32.mrb[0].mxu0
        %531 = vmatprep.mubr.f32.mxu0 0.0
        %532 = vmatmul.mubr.f32.gmra.mrb[0].mxu0 %v410
        %v533 = vpop.f32.mrb[0].mxu0
        %v534 = vadd.f32 0.0, %v533
        %v535 = vpop.f32.mrb[0].mxu0
        %536 = vmatprep.mubr.f32.mxu0 0.0
        %537 = vmatmul.mubr.f32.gmra.mrb[0].mxu0 %v413
        %v538 = vpop.f32.mrb[0].mxu0
        %v539 = vadd.f32 0.0, %v538
        %v540 = vpop.f32.mrb[0].mxu0
        %541 = vmatprep.mubr.f32.mxu0 0.0
        %542 = vmatmul.mubr.f32.gmra.mrb[0].mxu0 %v416
        %v543 = vpop.f32.mrb[0].mxu0
        %v544 = vadd.f32 0.0, %v543
        %v545 = vpop.f32.mrb[0].mxu0
        %546 = vmatprep.mubr.f32.mxu0 0.0
        %547 = vmatmul.mubr.f32.gmra.mrb[0].mxu0 %v419
        %v548 = vpop.f32.mrb[0].mxu0
        %v549 = vadd.f32 0.0, %v548
        %v550 = vpop.f32.mrb[0].mxu0
        %551 = vmatprep.mubr.f32.mxu0 0.0
        %552 = vmatmul.mubr.f32.gmra.mrb[0].mxu0 %v422
        %v553 = vpop.f32.mrb[0].mxu0
        %v554 = vadd.f32 0.0, %v553
        %v555 = vpop.f32.mrb[0].mxu0
        %556 = vmatprep.mubr.f32.mxu0 0.0
        %557 = vmatmul.mubr.f32.gmra.mrb[0].mxu0 %v425
        %v558 = vpop.f32.mrb[0].mxu0
        %v559 = vadd.f32 0.0, %v558
        %v560 = vpop.f32.mrb[0].mxu0
        %561 = vmatprep.mubr.f32.mxu0 0.0
        %562 = vmatmul.mubr.f32.gmra.mrb[0].mxu0 %v428
        %v563 = vpop.f32.mrb[0].mxu0
        %v564 = vadd.f32 0.0, %v563
        %v565 = vpop.f32.mrb[0].mxu0
        %566 = vmatprep.mubr.f32.mxu0 0.0
        %567 = vmatmul.mubr.f32.gmra.mrb[0].mxu0 %v431
        %v568 = vpop.f32.mrb[0].mxu0
        %v569 = vadd.f32 0.0, %v568
        %v570 = vpop.f32.mrb[0].mxu0
        %571 = vmatprep.mubr.f32.mxu0 0.0
        %572 = vmatmul.mubr.f32.gmra.mrb[0].mxu0 %v434
        %v573 = vpop.f32.mrb[0].mxu0
        %v574 = vadd.f32 0.0, %v573
        %v575 = vpop.f32.mrb[0].mxu0
        %576 = vmatprep.mubr.f32.mxu0 0.0
        %577 = vmatmul.mubr.f32.gmra.mrb[0].mxu0 %v437
        %v578 = vpop.f32.mrb[0].mxu0
        %v579 = vadd.f32 0.0, %v578
        %v580 = vpop.f32.mrb[0].mxu0
        %581 = vmatprep.mubr.f32.mxu0 0.0
        %582 = vmatmul.mubr.f32.gmra.mrb[0].mxu0 %v440
        %v583 = vpop.f32.mrb[0].mxu0
        %v584 = vadd.f32 0.0, %v583
        %v585 = vpop.f32.mrb[0].mxu0
        %586 = vdwg.mxu0
        %v588 = vsel %vm393, %v373, 0
        %v591 = vsel %vm393, %v374, 0
        %v594 = vsel %vm393, %v375, 0
        %v597 = vsel %vm393, %v376, 0
        %v600 = vsel %vm393, %v377, 0
        %v603 = vsel %vm393, %v378, 0
        %v606 = vsel %vm393, %v379, 0
        %v609 = vsel %vm393, %v380, 0
        %v612 = vsel %vm393, %v381, 0
        %v615 = vsel %vm393, %v382, 0
        %v618 = vsel %vm393, %v383, 0
        %v621 = vsel %vm393, %v384, 0
        %v624 = vsel %vm393, %v385, 0
        %v627 = vsel %vm393, %v386, 0
        %v630 = vsel %vm393, %v387, 0
        %v633 = vsel %vm393, %v388, 0
        %635 = vmatprep.subr.mxu0 0.0
        %636 = vmatpush1.msra.mxu0 %v391
        %637 = vmatprep.subr.mxu0 0.0
        %638 = vmatpush1.msra.mxu0 %v392
        %639 = vmatprep.subr.mxu0 0.0
        %640 = vmatpush1.msra.mxu0 0.0
        %641 = vmatprep.subr.mxu0 0.0
        %642 = vmatpush1.msra.mxu0 0.0
        %643 = vmatprep.subr.mxu0 0.0
        %644 = vmatpush1.msra.mxu0 0.0
        %645 = vmatprep.subr.mxu0 0.0
        %646 = vmatpush1.msra.mxu0 0.0
        %647 = vmatprep.subr.mxu0 0.0
        %648 = vmatpush1.msra.mxu0 0.0
        %649 = vmatprep.subr.mxu0 0.0
        %650 = vmatpush1.msra.mxu0 0.0
        %651 = vmatprep.subr.mxu0 0.0
        %652 = vmatpush1.msra.mxu0 0.0
        %653 = vmatprep.subr.mxu0 0.0
        %654 = vmatpush1.msra.mxu0 0.0
        %655 = vmatprep.subr.mxu0 0.0
        %656 = vmatpush1.msra.mxu0 0.0
        %657 = vmatprep.subr.mxu0 0.0
        %658 = vmatpush1.msra.mxu0 0.0
        %659 = vmatprep.subr.mxu0 0.0
        %660 = vmatpush1.msra.mxu0 0.0
        %661 = vmatprep.subr.mxu0 0.0
        %662 = vmatpush1.msra.mxu0 0.0
        %663 = vmatprep.subr.mxu0 0.0
        %664 = vmatpush1.msra.mxu0 0.0
        %665 = vmatprep.subr.mxu0 0.0
        %666 = vmatpush1.msra.mxu0 0.0
        %667 = vmatprep.subr.mxu0 0.0
        %668 = vmatpush1.msra.mxu0 0.0
        %669 = vmatprep.subr.mxu0 0.0
        %670 = vmatpush1.msra.mxu0 0.0
        %671 = vmatprep.subr.mxu0 0.0
        %672 = vmatpush1.msra.mxu0 0.0
        %673 = vmatprep.subr.mxu0 0.0
        %674 = vmatpush1.msra.mxu0 0.0
        %675 = vmatprep.subr.mxu0 0.0
        %676 = vmatpush1.msra.mxu0 0.0
        %677 = vmatprep.subr.mxu0 0.0
        %678 = vmatpush1.msra.mxu0 0.0
        %679 = vmatprep.subr.mxu0 0.0
        %680 = vmatpush1.msra.mxu0 0.0
        %681 = vmatprep.subr.mxu0 0.0
        %682 = vmatpush1.msra.mxu0 0.0
        %683 = vmatprep.subr.mxu0 0.0
        %684 = vmatpush1.msra.mxu0 0.0
        %685 = vmatprep.subr.mxu0 0.0
        %686 = vmatpush1.msra.mxu0 0.0
        %687 = vmatprep.subr.mxu0 0.0
        %688 = vmatpush1.msra.mxu0 0.0
        %689 = vmatprep.subr.mxu0 0.0
        %690 = vmatpush1.msra.mxu0 0.0
        %691 = vmatprep.subr.mxu0 0.0
        %692 = vmatpush1.msra.mxu0 0.0
        %693 = vmatprep.subr.mxu0 0.0
        %694 = vmatpush1.msra.mxu0 0.0
        %695 = vmatprep.subr.mxu0 0.0
        %696 = vmatpush1.msra.mxu0 0.0
        %697 = vmatprep.subr.mxu0 0.0
        %698 = vmatpush1.msra.mxu0 0.0
        %699 = vmatprep.mubr.f32.mxu0 0.0
        %700 = vmatmul.mubr.f32.gmra.mrb[0].mxu0 %v588
        %v701 = vpop.f32.mrb[0].mxu0
        %v702 = vadd.f32 0.0, %v701
        %v703 = vpop.f32.mrb[0].mxu0
        %704 = vmatprep.mubr.f32.mxu0 0.0
        %705 = vmatmul.mubr.f32.gmra.mrb[0].mxu0 %v591
        %v706 = vpop.f32.mrb[0].mxu0
        %v707 = vadd.f32 0.0, %v706
        %v708 = vpop.f32.mrb[0].mxu0
        %709 = vmatprep.mubr.f32.mxu0 0.0
        %710 = vmatmul.mubr.f32.gmra.mrb[0].mxu0 %v594
        %v711 = vpop.f32.mrb[0].mxu0
        %v712 = vadd.f32 0.0, %v711
        %v713 = vpop.f32.mrb[0].mxu0
        %714 = vmatprep.mubr.f32.mxu0 0.0
        %715 = vmatmul.mubr.f32.gmra.mrb[0].mxu0 %v597
        %v716 = vpop.f32.mrb[0].mxu0
        %v717 = vadd.f32 0.0, %v716
        %v718 = vpop.f32.mrb[0].mxu0
        %719 = vmatprep.mubr.f32.mxu0 0.0
        %720 = vmatmul.mubr.f32.gmra.mrb[0].mxu0 %v600
        %v721 = vpop.f32.mrb[0].mxu0
        %v722 = vadd.f32 0.0, %v721
        %v723 = vpop.f32.mrb[0].mxu0
        %724 = vmatprep.mubr.f32.mxu0 0.0
        %725 = vmatmul.mubr.f32.gmra.mrb[0].mxu0 %v603
        %v726 = vpop.f32.mrb[0].mxu0
        %v727 = vadd.f32 0.0, %v726
        %v728 = vpop.f32.mrb[0].mxu0
        %729 = vmatprep.mubr.f32.mxu0 0.0
        %730 = vmatmul.mubr.f32.gmra.mrb[0].mxu0 %v606
        %v731 = vpop.f32.mrb[0].mxu0
        %v732 = vadd.f32 0.0, %v731
        %v733 = vpop.f32.mrb[0].mxu0
        %734 = vmatprep.mubr.f32.mxu0 0.0
        %735 = vmatmul.mubr.f32.gmra.mrb[0].mxu0 %v609
        %v736 = vpop.f32.mrb[0].mxu0
        %v737 = vadd.f32 0.0, %v736
        %v738 = vpop.f32.mrb[0].mxu0
        %739 = vmatprep.mubr.f32.mxu0 0.0
        %740 = vmatmul.mubr.f32.gmra.mrb[0].mxu0 %v612
        %v741 = vpop.f32.mrb[0].mxu0
        %v742 = vadd.f32 0.0, %v741
        %v743 = vpop.f32.mrb[0].mxu0
        %744 = vmatprep.mubr.f32.mxu0 0.0
        %745 = vmatmul.mubr.f32.gmra.mrb[0].mxu0 %v615
        %v746 = vpop.f32.mrb[0].mxu0
        %v747 = vadd.f32 0.0, %v746
        %v748 = vpop.f32.mrb[0].mxu0
        %749 = vmatprep.mubr.f32.mxu0 0.0
        %750 = vmatmul.mubr.f32.gmra.mrb[0].mxu0 %v618
        %v751 = vpop.f32.mrb[0].mxu0
        %v752 = vadd.f32 0.0, %v751
        %v753 = vpop.f32.mrb[0].mxu0
        %754 = vmatprep.mubr.f32.mxu0 0.0
        %755 = vmatmul.mubr.f32.gmra.mrb[0].mxu0 %v621
        %v756 = vpop.f32.mrb[0].mxu0
        %v757 = vadd.f32 0.0, %v756
        %v758 = vpop.f32.mrb[0].mxu0
        %759 = vmatprep.mubr.f32.mxu0 0.0
        %760 = vmatmul.mubr.f32.gmra.mrb[0].mxu0 %v624
        %v761 = vpop.f32.mrb[0].mxu0
        %v762 = vadd.f32 0.0, %v761
        %v763 = vpop.f32.mrb[0].mxu0
        %764 = vmatprep.mubr.f32.mxu0 0.0
        %765 = vmatmul.mubr.f32.gmra.mrb[0].mxu0 %v627
        %v766 = vpop.f32.mrb[0].mxu0
        %v767 = vadd.f32 0.0, %v766
        %v768 = vpop.f32.mrb[0].mxu0
        %769 = vmatprep.mubr.f32.mxu0 0.0
        %770 = vmatmul.mubr.f32.gmra.mrb[0].mxu0 %v630
        %v771 = vpop.f32.mrb[0].mxu0
        %v772 = vadd.f32 0.0, %v771
        %v773 = vpop.f32.mrb[0].mxu0
        %774 = vmatprep.mubr.f32.mxu0 0.0
        %775 = vmatmul.mubr.f32.gmra.mrb[0].mxu0 %v633
        %v776 = vpop.f32.mrb[0].mxu0
        %v777 = vadd.f32 0.0, %v776
        %v778 = vpop.f32.mrb[0].mxu0
        %779 = vdwg.mxu0
        %s780 = sadd.s32 %s24, 1
        %s781 = smul.u32 %s780, 128
        %p782 = scmp.gt.s32.totalorder %s781, 8
        // Predicated region
        $region37: #{tpu_custom_call.1} parent=31 // pred_check
          %p783 = pneg %p782
        $region38: #{tpu_custom_call.1} parent=31 // pred_check_branch
          %785 = sbr.rel (%p783) target = $region40
        $region39: #{tpu_custom_call.1} parent=31 // pred_region
          %s786 = smul.u32 %s24, 128
          %v787 = vlaneseq
          %v788 = vand.u32 %v787, 127
          %v789 = vstv %s786
          %v790 = vadd.s32 %v789, %v788
          %vm791 = vcmp.lt.s32.totalorder %v790, 8
          %v792 = vsel %vm791, %v509, -1e+30
          %v793 = vsel %vm791, %v514, -1e+30
          %v794 = vsel %vm791, %v519, -1e+30
          %v795 = vsel %vm791, %v524, -1e+30
          %v796 = vsel %vm791, %v529, -1e+30
          %v797 = vsel %vm791, %v534, -1e+30
          %v798 = vsel %vm791, %v539, -1e+30
          %v799 = vsel %vm791, %v544, -1e+30
          %v800 = vsel %vm791, %v549, -1e+30
          %v801 = vsel %vm791, %v554, -1e+30
          %v802 = vsel %vm791, %v559, -1e+30
          %v803 = vsel %vm791, %v564, -1e+30
          %v804 = vsel %vm791, %v569, -1e+30
          %v805 = vsel %vm791, %v574, -1e+30
          %v806 = vsel %vm791, %v579, -1e+30
          %v807 = vsel %vm791, %v584, -1e+30
          %v808 = vsel %vm791, %v702, -1e+30
          %v809 = vsel %vm791, %v707, -1e+30
          %v810 = vsel %vm791, %v712, -1e+30
          %v811 = vsel %vm791, %v717, -1e+30
          %v812 = vsel %vm791, %v722, -1e+30
          %v813 = vsel %vm791, %v727, -1e+30
          %v814 = vsel %vm791, %v732, -1e+30
          %v815 = vsel %vm791, %v737, -1e+30
          %v816 = vsel %vm791, %v742, -1e+30
          %v817 = vsel %vm791, %v747, -1e+30
          %v818 = vsel %vm791, %v752, -1e+30
          %v819 = vsel %vm791, %v757, -1e+30
          %v820 = vsel %vm791, %v762, -1e+30
          %v821 = vsel %vm791, %v767, -1e+30
          %v822 = vsel %vm791, %v772, -1e+30
          %v823 = vsel %vm791, %v777, -1e+30
        $region40: #{tpu_custom_call.1} parent=31 // pred_fallthru
          %v824 = vphi 0, %v792
          %v825 = vphi 0, %v793
          %v826 = vphi 0, %v794
          %v827 = vphi 0, %v795
          %v828 = vphi 0, %v796
          %v829 = vphi 0, %v797
          %v830 = vphi 0, %v798
          %v831 = vphi 0, %v799
          %v832 = vphi 0, %v800
          %v833 = vphi 0, %v801
          %v834 = vphi 0, %v802
          %v835 = vphi 0, %v803
          %v836 = vphi 0, %v804
          %v837 = vphi 0, %v805
          %v838 = vphi 0, %v806
          %v839 = vphi 0, %v807
          %v840 = vphi 0, %v808
          %v841 = vphi 0, %v809
          %v842 = vphi 0, %v810
          %v843 = vphi 0, %v811
          %v844 = vphi 0, %v812
          %v845 = vphi 0, %v813
          %v846 = vphi 0, %v814
          %v847 = vphi 0, %v815
          %v848 = vphi 0, %v816
          %v849 = vphi 0, %v817
          %v850 = vphi 0, %v818
          %v851 = vphi 0, %v819
          %v852 = vphi 0, %v820
          %v853 = vphi 0, %v821
          %v854 = vphi 0, %v822
          %v855 = vphi 0, %v823
        %p856 = pneg %p782
        // Predicated region
        $region41: #{tpu_custom_call.1} parent=31 // pred_check
          _
        $region42: #{tpu_custom_call.1} parent=31 // pred_check_branch
          %858 = sbr.rel (%p782) target = $region44
        $region43: #{tpu_custom_call.1} parent=31 // pred_region
          _
        $region44: #{tpu_custom_call.1} parent=31 // pred_fallthru
          %v859 = vphi %v824, %v509
          %v860 = vphi %v825, %v514
          %v861 = vphi %v826, %v519
          %v862 = vphi %v827, %v524
          %v863 = vphi %v828, %v529
          %v864 = vphi %v829, %v534
          %v865 = vphi %v830, %v539
          %v866 = vphi %v831, %v544
          %v867 = vphi %v832, %v549
          %v868 = vphi %v833, %v554
          %v869 = vphi %v834, %v559
          %v870 = vphi %v835, %v564
          %v871 = vphi %v836, %v569
          %v872 = vphi %v837, %v574
          %v873 = vphi %v838, %v579
          %v874 = vphi %v839, %v584
          %v875 = vphi %v840, %v702
          %v876 = vphi %v841, %v707
          %v877 = vphi %v842, %v712
          %v878 = vphi %v843, %v717
          %v879 = vphi %v844, %v722
          %v880 = vphi %v845, %v727
          %v881 = vphi %v846, %v732
          %v882 = vphi %v847, %v737
          %v883 = vphi %v848, %v742
          %v884 = vphi %v849, %v747
          %v885 = vphi %v850, %v752
          %v886 = vphi %v851, %v757
          %v887 = vphi %v852, %v762
          %v888 = vphi %v853, %v767
          %v889 = vphi %v854, %v772
          %v890 = vphi %v855, %v777
        %v891 = vld [vmem:[#allocation2] sm:$0xff]
        %v892 = vld [vmem:[#allocation2 + $0x8] sm:$0xff]
        %v893 = vld [vmem:[#allocation2 + $0x10] sm:$0xff]
        %v894 = vld [vmem:[#allocation2 + $0x18] sm:$0xff]
        %v895 = vld [vmem:[#allocation2 + $0x20] sm:$0xff]
        %v896 = vld [vmem:[#allocation2 + $0x28] sm:$0xff]
        %v897 = vld [vmem:[#allocation2 + $0x30] sm:$0xff]
        %v898 = vld [vmem:[#allocation2 + $0x38] sm:$0xff]
        %v899 = vld [vmem:[#allocation2 + $0x40] sm:$0xff]
        %v900 = vld [vmem:[#allocation2 + $0x48] sm:$0xff]
        %v901 = vld [vmem:[#allocation2 + $0x50] sm:$0xff]
        %v902 = vld [vmem:[#allocation2 + $0x58] sm:$0xff]
        %v903 = vld [vmem:[#allocation2 + $0x60] sm:$0xff]
        %v904 = vld [vmem:[#allocation2 + $0x68] sm:$0xff]
        %v905 = vld [vmem:[#allocation2 + $0x70] sm:$0xff]
        %v906 = vld [vmem:[#allocation2 + $0x78] sm:$0xff]
        %v907 = vld [vmem:[#allocation2 + $0x80] sm:$0xff]
        %v908 = vld [vmem:[#allocation2 + $0x88] sm:$0xff]
        %v909 = vld [vmem:[#allocation2 + $0x90] sm:$0xff]
        %v910 = vld [vmem:[#allocation2 + $0x98] sm:$0xff]
        %v911 = vld [vmem:[#allocation2 + $0xa0] sm:$0xff]
        %v912 = vld [vmem:[#allocation2 + $0xa8] sm:$0xff]
        %v913 = vld [vmem:[#allocation2 + $0xb0] sm:$0xff]
        %v914 = vld [vmem:[#allocation2 + $0xb8] sm:$0xff]
        %v915 = vld [vmem:[#allocation2 + $0xc0] sm:$0xff]
        %v916 = vld [vmem:[#allocation2 + $0xc8] sm:$0xff]
        %v917 = vld [vmem:[#allocation2 + $0xd0] sm:$0xff]
        %v918 = vld [vmem:[#allocation2 + $0xd8] sm:$0xff]
        %v919 = vld [vmem:[#allocation2 + $0xe0] sm:$0xff]
        %v920 = vld [vmem:[#allocation2 + $0xe8] sm:$0xff]
        %v921 = vld [vmem:[#allocation2 + $0xf0] sm:$0xff]
        %v922 = vld [vmem:[#allocation2 + $0xf8] sm:$0xff]
        %923 = vmax.xlane.f32.xlu0 %v859
        %v924 = vpop.xlane.xlu0 %923
        %925 = vmax.xlane.f32.xlu0 %v860
        %v926 = vpop.xlane.xlu0 %925
        %927 = vmax.xlane.f32.xlu0 %v861
        %v928 = vpop.xlane.xlu0 %927
        %929 = vmax.xlane.f32.xlu0 %v862
        %v930 = vpop.xlane.xlu0 %929
        %931 = vmax.xlane.f32.xlu0 %v863
        %v932 = vpop.xlane.xlu0 %931
        %933 = vmax.xlane.f32.xlu0 %v864
        %v934 = vpop.xlane.xlu0 %933
        %935 = vmax.xlane.f32.xlu0 %v865
        %v936 = vpop.xlane.xlu0 %935
        %937 = vmax.xlane.f32.xlu0 %v866
        %v938 = vpop.xlane.xlu0 %937
        %939 = vmax.xlane.f32.xlu0 %v867
        %v940 = vpop.xlane.xlu0 %939
        %941 = vmax.xlane.f32.xlu0 %v868
        %v942 = vpop.xlane.xlu0 %941
        %943 = vmax.xlane.f32.xlu0 %v869
        %v944 = vpop.xlane.xlu0 %943
        %945 = vmax.xlane.f32.xlu0 %v870
        %v946 = vpop.xlane.xlu0 %945
        %947 = vmax.xlane.f32.xlu0 %v871
        %v948 = vpop.xlane.xlu0 %947
        %949 = vmax.xlane.f32.xlu0 %v872
        %v950 = vpop.xlane.xlu0 %949
        %951 = vmax.xlane.f32.xlu0 %v873
        %v952 = vpop.xlane.xlu0 %951
        %953 = vmax.xlane.f32.xlu0 %v874
        %v954 = vpop.xlane.xlu0 %953
        %955 = vmax.xlane.f32.xlu0 %v875
        %v956 = vpop.xlane.xlu0 %955
        %957 = vmax.xlane.f32.xlu0 %v876
        %v958 = vpop.xlane.xlu0 %957
        %959 = vmax.xlane.f32.xlu0 %v877
        %v960 = vpop.xlane.xlu0 %959
        %961 = vmax.xlane.f32.xlu0 %v878
        %v962 = vpop.xlane.xlu0 %961
        %963 = vmax.xlane.f32.xlu0 %v879
        %v964 = vpop.xlane.xlu0 %963
        %965 = vmax.xlane.f32.xlu0 %v880
        %v966 = vpop.xlane.xlu0 %965
        %967 = vmax.xlane.f32.xlu0 %v881
        %v968 = vpop.xlane.xlu0 %967
        %969 = vmax.xlane.f32.xlu0 %v882
        %v970 = vpop.xlane.xlu0 %969
        %971 = vmax.xlane.f32.xlu0 %v883
        %v972 = vpop.xlane.xlu0 %971
        %973 = vmax.xlane.f32.xlu0 %v884
        %v974 = vpop.xlane.xlu0 %973
        %975 = vmax.xlane.f32.xlu0 %v885
        %v976 = vpop.xlane.xlu0 %975
        %977 = vmax.xlane.f32.xlu0 %v886
        %v978 = vpop.xlane.xlu0 %977
        %979 = vmax.xlane.f32.xlu0 %v887
        %v980 = vpop.xlane.xlu0 %979
        %981 = vmax.xlane.f32.xlu0 %v888
        %v982 = vpop.xlane.xlu0 %981
        %983 = vmax.xlane.f32.xlu0 %v889
        %v984 = vpop.xlane.xlu0 %983
        %985 = vmax.xlane.f32.xlu0 %v890
        %v986 = vpop.xlane.xlu0 %985
        %v987 = vmax.f32 %v891, %v924
        %v988 = vmax.f32 %v892, %v926
        %v989 = vmax.f32 %v893, %v928
        %v990 = vmax.f32 %v894, %v930
        %v991 = vmax.f32 %v895, %v932
        %v992 = vmax.f32 %v896, %v934
        %v993 = vmax.f32 %v897, %v936
        %v994 = vmax.f32 %v898, %v938
        %v995 = vmax.f32 %v899, %v940
        %v996 = vmax.f32 %v900, %v942
        %v997 = vmax.f32 %v901, %v944
        %v998 = vmax.f32 %v902, %v946
        %v999 = vmax.f32 %v903, %v948
        %v1000 = vmax.f32 %v904, %v950
        %v1001 = vmax.f32 %v905, %v952
        %v1002 = vmax.f32 %v906, %v954
        %v1003 = vmax.f32 %v907, %v956
        %v1004 = vmax.f32 %v908, %v958
        %v1005 = vmax.f32 %v909, %v960
        %v1006 = vmax.f32 %v910, %v962
        %v1007 = vmax.f32 %v911, %v964
        %v1008 = vmax.f32 %v912, %v966
        %v1009 = vmax.f32 %v913, %v968
        %v1010 = vmax.f32 %v914, %v970
        %v1011 = vmax.f32 %v915, %v972
        %v1012 = vmax.f32 %v916, %v974
        %v1013 = vmax.f32 %v917, %v976
        %v1014 = vmax.f32 %v918, %v978
        %v1015 = vmax.f32 %v919, %v980
        %v1016 = vmax.f32 %v920, %v982
        %v1017 = vmax.f32 %v921, %v984
        %v1018 = vmax.f32 %v922, %v986
        %v1019 = vsub.f32 %v891, %v987
        %v1020 = vsub.f32 %v892, %v988
        %v1021 = vsub.f32 %v893, %v989
        %v1022 = vsub.f32 %v894, %v990
        %v1023 = vsub.f32 %v895, %v991
        %v1024 = vsub.f32 %v896, %v992
        %v1025 = vsub.f32 %v897, %v993
        %v1026 = vsub.f32 %v898, %v994
        %v1027 = vsub.f32 %v899, %v995
        %v1028 = vsub.f32 %v900, %v996
        %v1029 = vsub.f32 %v901, %v997
        %v1030 = vsub.f32 %v902, %v998
        %v1031 = vsub.f32 %v903, %v999
        %v1032 = vsub.f32 %v904, %v1000
        %v1033 = vsub.f32 %v905, %v1001
        %v1034 = vsub.f32 %v906, %v1002
        %v1035 = vsub.f32 %v907, %v1003
        %v1036 = vsub.f32 %v908, %v1004
        %v1037 = vsub.f32 %v909, %v1005
        %v1038 = vsub.f32 %v910, %v1006
        %v1039 = vsub.f32 %v911, %v1007
        %v1040 = vsub.f32 %v912, %v1008
        %v1041 = vsub.f32 %v913, %v1009
        %v1042 = vsub.f32 %v914, %v1010
        %v1043 = vsub.f32 %v915, %v1011
        %v1044 = vsub.f32 %v916, %v1012
        %v1045 = vsub.f32 %v917, %v1013
        %v1046 = vsub.f32 %v918, %v1014
        %v1047 = vsub.f32 %v919, %v1015
        %v1048 = vsub.f32 %v920, %v1016
        %v1049 = vsub.f32 %v921, %v1017
        %v1050 = vsub.f32 %v922, %v1018
        %v1051 = vmul.f32 %v1019, 1.442695
        %v1052 = vpow.pop %v1051
        %v1053 = vmul.f32 %v1020, 1.442695
        %v1054 = vpow.pop %v1053
        %v1055 = vmul.f32 %v1021, 1.442695
        %v1056 = vpow.pop %v1055
        %v1057 = vmul.f32 %v1022, 1.442695
        %v1058 = vpow.pop %v1057
        %v1059 = vmul.f32 %v1023, 1.442695
        %v1060 = vpow.pop %v1059
        %v1061 = vmul.f32 %v1024, 1.442695
        %v1062 = vpow.pop %v1061
        %v1063 = vmul.f32 %v1025, 1.442695
        %v1064 = vpow.pop %v1063
        %v1065 = vmul.f32 %v1026, 1.442695
        %v1066 = vpow.pop %v1065
        %v1067 = vmul.f32 %v1027, 1.442695
        %v1068 = vpow.pop %v1067
        %v1069 = vmul.f32 %v1028, 1.442695
        %v1070 = vpow.pop %v1069
        %v1071 = vmul.f32 %v1029, 1.442695
        %v1072 = vpow.pop %v1071
        %v1073 = vmul.f32 %v1030, 1.442695
        %v1074 = vpow.pop %v1073
        %v1075 = vmul.f32 %v1031, 1.442695
        %v1076 = vpow.pop %v1075
        %v1077 = vmul.f32 %v1032, 1.442695
        %v1078 = vpow.pop %v1077
        %v1079 = vmul.f32 %v1033, 1.442695
        %v1080 = vpow.pop %v1079
        %v1081 = vmul.f32 %v1034, 1.442695
        %v1082 = vpow.pop %v1081
        %v1083 = vmul.f32 %v1035, 1.442695
        %v1084 = vpow.pop %v1083
        %v1085 = vmul.f32 %v1036, 1.442695
        %v1086 = vpow.pop %v1085
        %v1087 = vmul.f32 %v1037, 1.442695
        %v1088 = vpow.pop %v1087
        %v1089 = vmul.f32 %v1038, 1.442695
        %v1090 = vpow.pop %v1089
        %v1091 = vmul.f32 %v1039, 1.442695
        %v1092 = vpow.pop %v1091
        %v1093 = vmul.f32 %v1040, 1.442695
        %v1094 = vpow.pop %v1093
        %v1095 = vmul.f32 %v1041, 1.442695
        %v1096 = vpow.pop %v1095
        %v1097 = vmul.f32 %v1042, 1.442695
        %v1098 = vpow.pop %v1097
        %v1099 = vmul.f32 %v1043, 1.442695
        %v1100 = vpow.pop %v1099
        %v1101 = vmul.f32 %v1044, 1.442695
        %v1102 = vpow.pop %v1101
        %v1103 = vmul.f32 %v1045, 1.442695
        %v1104 = vpow.pop %v1103
        %v1105 = vmul.f32 %v1046, 1.442695
        %v1106 = vpow.pop %v1105
        %v1107 = vmul.f32 %v1047, 1.442695
        %v1108 = vpow.pop %v1107
        %v1109 = vmul.f32 %v1048, 1.442695
        %v1110 = vpow.pop %v1109
        %v1111 = vmul.f32 %v1049, 1.442695
        %v1112 = vpow.pop %v1111
        %v1113 = vmul.f32 %v1050, 1.442695
        %v1114 = vpow.pop %v1113
        %1116 = vset.pattern.permute.xlu0 0
        %1117 = vperm.xlu0 %1116, %v987
        %v1118 = vpop.permute.xlu0 %1117
        %1121 = vset.pattern.permute.xlu0 0
        %1122 = vperm.xlu0 %1121, %v988
        %v1123 = vpop.permute.xlu0 %1122
        %1126 = vset.pattern.permute.xlu0 0
        %1127 = vperm.xlu0 %1126, %v989
        %v1128 = vpop.permute.xlu0 %1127
        %1131 = vset.pattern.permute.xlu0 0
        %1132 = vperm.xlu0 %1131, %v990
        %v1133 = vpop.permute.xlu0 %1132
        %1136 = vset.pattern.permute.xlu0 0
        %1137 = vperm.xlu0 %1136, %v991
        %v1138 = vpop.permute.xlu0 %1137
        %1141 = vset.pattern.permute.xlu0 0
        %1142 = vperm.xlu0 %1141, %v992
        %v1143 = vpop.permute.xlu0 %1142
        %1146 = vset.pattern.permute.xlu0 0
        %1147 = vperm.xlu0 %1146, %v993
        %v1148 = vpop.permute.xlu0 %1147
        %1151 = vset.pattern.permute.xlu0 0
        %1152 = vperm.xlu0 %1151, %v994
        %v1153 = vpop.permute.xlu0 %1152
        %1156 = vset.pattern.permute.xlu0 0
        %1157 = vperm.xlu0 %1156, %v995
        %v1158 = vpop.permute.xlu0 %1157
        %1161 = vset.pattern.permute.xlu0 0
        %1162 = vperm.xlu0 %1161, %v996
        %v1163 = vpop.permute.xlu0 %1162
        %1166 = vset.pattern.permute.xlu0 0
        %1167 = vperm.xlu0 %1166, %v997
        %v1168 = vpop.permute.xlu0 %1167
        %1171 = vset.pattern.permute.xlu0 0
        %1172 = vperm.xlu0 %1171, %v998
        %v1173 = vpop.permute.xlu0 %1172
        %1176 = vset.pattern.permute.xlu0 0
        %1177 = vperm.xlu0 %1176, %v999
        %v1178 = vpop.permute.xlu0 %1177
        %1181 = vset.pattern.permute.xlu0 0
        %1182 = vperm.xlu0 %1181, %v1000
        %v1183 = vpop.permute.xlu0 %1182
        %1186 = vset.pattern.permute.xlu0 0
        %1187 = vperm.xlu0 %1186, %v1001
        %v1188 = vpop.permute.xlu0 %1187
        %1191 = vset.pattern.permute.xlu0 0
        %1192 = vperm.xlu0 %1191, %v1002
        %v1193 = vpop.permute.xlu0 %1192
        %1196 = vset.pattern.permute.xlu0 0
        %1197 = vperm.xlu0 %1196, %v1003
        %v1198 = vpop.permute.xlu0 %1197
        %1201 = vset.pattern.permute.xlu0 0
        %1202 = vperm.xlu0 %1201, %v1004
        %v1203 = vpop.permute.xlu0 %1202
        %1206 = vset.pattern.permute.xlu0 0
        %1207 = vperm.xlu0 %1206, %v1005
        %v1208 = vpop.permute.xlu0 %1207
        %1211 = vset.pattern.permute.xlu0 0
        %1212 = vperm.xlu0 %1211, %v1006
        %v1213 = vpop.permute.xlu0 %1212
        %1216 = vset.pattern.permute.xlu0 0
        %1217 = vperm.xlu0 %1216, %v1007
        %v1218 = vpop.permute.xlu0 %1217
        %1221 = vset.pattern.permute.xlu0 0
        %1222 = vperm.xlu0 %1221, %v1008
        %v1223 = vpop.permute.xlu0 %1222
        %1226 = vset.pattern.permute.xlu0 0
        %1227 = vperm.xlu0 %1226, %v1009
        %v1228 = vpop.permute.xlu0 %1227
        %1231 = vset.pattern.permute.xlu0 0
        %1232 = vperm.xlu0 %1231, %v1010
        %v1233 = vpop.permute.xlu0 %1232
        %1236 = vset.pattern.permute.xlu0 0
        %1237 = vperm.xlu0 %1236, %v1011
        %v1238 = vpop.permute.xlu0 %1237
        %1241 = vset.pattern.permute.xlu0 0
        %1242 = vperm.xlu0 %1241, %v1012
        %v1243 = vpop.permute.xlu0 %1242
        %1246 = vset.pattern.permute.xlu0 0
        %1247 = vperm.xlu0 %1246, %v1013
        %v1248 = vpop.permute.xlu0 %1247
        %1251 = vset.pattern.permute.xlu0 0
        %1252 = vperm.xlu0 %1251, %v1014
        %v1253 = vpop.permute.xlu0 %1252
        %1256 = vset.pattern.permute.xlu0 0
        %1257 = vperm.xlu0 %1256, %v1015
        %v1258 = vpop.permute.xlu0 %1257
        %1261 = vset.pattern.permute.xlu0 0
        %1262 = vperm.xlu0 %1261, %v1016
        %v1263 = vpop.permute.xlu0 %1262
        %1266 = vset.pattern.permute.xlu0 0
        %1267 = vperm.xlu0 %1266, %v1017
        %v1268 = vpop.permute.xlu0 %1267
        %1271 = vset.pattern.permute.xlu0 0
        %1272 = vperm.xlu0 %1271, %v1018
        %v1273 = vpop.permute.xlu0 %1272
        %v1275 = vsub.f32 %v859, %v1118
        %v1276 = vsub.f32 %v860, %v1123
        %v1277 = vsub.f32 %v861, %v1128
        %v1278 = vsub.f32 %v862, %v1133
        %v1279 = vsub.f32 %v863, %v1138
        %v1280 = vsub.f32 %v864, %v1143
        %v1281 = vsub.f32 %v865, %v1148
        %v1282 = vsub.f32 %v866, %v1153
        %v1283 = vsub.f32 %v867, %v1158
        %v1284 = vsub.f32 %v868, %v1163
        %v1285 = vsub.f32 %v869, %v1168
        %v1286 = vsub.f32 %v870, %v1173
        %v1287 = vsub.f32 %v871, %v1178
        %v1288 = vsub.f32 %v872, %v1183
        %v1289 = vsub.f32 %v873, %v1188
        %v1290 = vsub.f32 %v874, %v1193
        %v1291 = vsub.f32 %v875, %v1198
        %v1292 = vsub.f32 %v876, %v1203
        %v1293 = vsub.f32 %v877, %v1208
        %v1294 = vsub.f32 %v878, %v1213
        %v1295 = vsub.f32 %v879, %v1218
        %v1296 = vsub.f32 %v880, %v1223
        %v1297 = vsub.f32 %v881, %v1228
        %v1298 = vsub.f32 %v882, %v1233
        %v1299 = vsub.f32 %v883, %v1238
        %v1300 = vsub.f32 %v884, %v1243
        %v1301 = vsub.f32 %v885, %v1248
        %v1302 = vsub.f32 %v886, %v1253
        %v1303 = vsub.f32 %v887, %v1258
        %v1304 = vsub.f32 %v888, %v1263
        %v1305 = vsub.f32 %v889, %v1268
        %v1306 = vsub.f32 %v890, %v1273
        %v1307 = vmul.f32 %v1275, 1.442695
        %v1308 = vpow.pop %v1307
        %v1309 = vmul.f32 %v1276, 1.442695
        %v1310 = vpow.pop %v1309
        %v1311 = vmul.f32 %v1277, 1.442695
        %v1312 = vpow.pop %v1311
        %v1313 = vmul.f32 %v1278, 1.442695
        %v1314 = vpow.pop %v1313
        %v1315 = vmul.f32 %v1279, 1.442695
        %v1316 = vpow.pop %v1315
        %v1317 = vmul.f32 %v1280, 1.442695
        %v1318 = vpow.pop %v1317
        %v1319 = vmul.f32 %v1281, 1.442695
        %v1320 = vpow.pop %v1319
        %v1321 = vmul.f32 %v1282, 1.442695
        %v1322 = vpow.pop %v1321
        %v1323 = vmul.f32 %v1283, 1.442695
        %v1324 = vpow.pop %v1323
        %v1325 = vmul.f32 %v1284, 1.442695
        %v1326 = vpow.pop %v1325
        %v1327 = vmul.f32 %v1285, 1.442695
        %v1328 = vpow.pop %v1327
        %v1329 = vmul.f32 %v1286, 1.442695
        %v1330 = vpow.pop %v1329
        %v1331 = vmul.f32 %v1287, 1.442695
        %v1332 = vpow.pop %v1331
        %v1333 = vmul.f32 %v1288, 1.442695
        %v1334 = vpow.pop %v1333
        %v1335 = vmul.f32 %v1289, 1.442695
        %v1336 = vpow.pop %v1335
        %v1337 = vmul.f32 %v1290, 1.442695
        %v1338 = vpow.pop %v1337
        %v1339 = vmul.f32 %v1291, 1.442695
        %v1340 = vpow.pop %v1339
        %v1341 = vmul.f32 %v1292, 1.442695
        %v1342 = vpow.pop %v1341
        %v1343 = vmul.f32 %v1293, 1.442695
        %v1344 = vpow.pop %v1343
        %v1345 = vmul.f32 %v1294, 1.442695
        %v1346 = vpow.pop %v1345
        %v1347 = vmul.f32 %v1295, 1.442695
        %v1348 = vpow.pop %v1347
        %v1349 = vmul.f32 %v1296, 1.442695
        %v1350 = vpow.pop %v1349
        %v1351 = vmul.f32 %v1297, 1.442695
        %v1352 = vpow.pop %v1351
        %v1353 = vmul.f32 %v1298, 1.442695
        %v1354 = vpow.pop %v1353
        %v1355 = vmul.f32 %v1299, 1.442695
        %v1356 = vpow.pop %v1355
        %v1357 = vmul.f32 %v1300, 1.442695
        %v1358 = vpow.pop %v1357
        %v1359 = vmul.f32 %v1301, 1.442695
        %v1360 = vpow.pop %v1359
        %v1361 = vmul.f32 %v1302, 1.442695
        %v1362 = vpow.pop %v1361
        %v1363 = vmul.f32 %v1303, 1.442695
        %v1364 = vpow.pop %v1363
        %v1365 = vmul.f32 %v1304, 1.442695
        %v1366 = vpow.pop %v1365
        %v1367 = vmul.f32 %v1305, 1.442695
        %v1368 = vpow.pop %v1367
        %v1369 = vmul.f32 %v1306, 1.442695
        %v1370 = vpow.pop %v1369
        %v1371 = vld [vmem:[#allocation3] sm:$0xff]
        %v1372 = vld [vmem:[#allocation3 + $0x8] sm:$0xff]
        %v1373 = vld [vmem:[#allocation3 + $0x10] sm:$0xff]
        %v1374 = vld [vmem:[#allocation3 + $0x18] sm:$0xff]
        %v1375 = vld [vmem:[#allocation3 + $0x20] sm:$0xff]
        %v1376 = vld [vmem:[#allocation3 + $0x28] sm:$0xff]
        %v1377 = vld [vmem:[#allocation3 + $0x30] sm:$0xff]
        %v1378 = vld [vmem:[#allocation3 + $0x38] sm:$0xff]
        %v1379 = vld [vmem:[#allocation3 + $0x40] sm:$0xff]
        %v1380 = vld [vmem:[#allocation3 + $0x48] sm:$0xff]
        %v1381 = vld [vmem:[#allocation3 + $0x50] sm:$0xff]
        %v1382 = vld [vmem:[#allocation3 + $0x58] sm:$0xff]
        %v1383 = vld [vmem:[#allocation3 + $0x60] sm:$0xff]
        %v1384 = vld [vmem:[#allocation3 + $0x68] sm:$0xff]
        %v1385 = vld [vmem:[#allocation3 + $0x70] sm:$0xff]
        %v1386 = vld [vmem:[#allocation3 + $0x78] sm:$0xff]
        %v1387 = vld [vmem:[#allocation3 + $0x80] sm:$0xff]
        %v1388 = vld [vmem:[#allocation3 + $0x88] sm:$0xff]
        %v1389 = vld [vmem:[#allocation3 + $0x90] sm:$0xff]
        %v1390 = vld [vmem:[#allocation3 + $0x98] sm:$0xff]
        %v1391 = vld [vmem:[#allocation3 + $0xa0] sm:$0xff]
        %v1392 = vld [vmem:[#allocation3 + $0xa8] sm:$0xff]
        %v1393 = vld [vmem:[#allocation3 + $0xb0] sm:$0xff]
        %v1394 = vld [vmem:[#allocation3 + $0xb8] sm:$0xff]
        %v1395 = vld [vmem:[#allocation3 + $0xc0] sm:$0xff]
        %v1396 = vld [vmem:[#allocation3 + $0xc8] sm:$0xff]
        %v1397 = vld [vmem:[#allocation3 + $0xd0] sm:$0xff]
        %v1398 = vld [vmem:[#allocation3 + $0xd8] sm:$0xff]
        %v1399 = vld [vmem:[#allocation3 + $0xe0] sm:$0xff]
        %v1400 = vld [vmem:[#allocation3 + $0xe8] sm:$0xff]
        %v1401 = vld [vmem:[#allocation3 + $0xf0] sm:$0xff]
        %v1402 = vld [vmem:[#allocation3 + $0xf8] sm:$0xff]
        %v1403 = vmul.f32 %v1052, %v1371
        %v1404 = vmul.f32 %v1054, %v1372
        %v1405 = vmul.f32 %v1056, %v1373
        %v1406 = vmul.f32 %v1058, %v1374
        %v1407 = vmul.f32 %v1060, %v1375
        %v1408 = vmul.f32 %v1062, %v1376
        %v1409 = vmul.f32 %v1064, %v1377
        %v1410 = vmul.f32 %v1066, %v1378
        %v1411 = vmul.f32 %v1068, %v1379
        %v1412 = vmul.f32 %v1070, %v1380
        %v1413 = vmul.f32 %v1072, %v1381
        %v1414 = vmul.f32 %v1074, %v1382
        %v1415 = vmul.f32 %v1076, %v1383
        %v1416 = vmul.f32 %v1078, %v1384
        %v1417 = vmul.f32 %v1080, %v1385
        %v1418 = vmul.f32 %v1082, %v1386
        %v1419 = vmul.f32 %v1084, %v1387
        %v1420 = vmul.f32 %v1086, %v1388
        %v1421 = vmul.f32 %v1088, %v1389
        %v1422 = vmul.f32 %v1090, %v1390
        %v1423 = vmul.f32 %v1092, %v1391
        %v1424 = vmul.f32 %v1094, %v1392
        %v1425 = vmul.f32 %v1096, %v1393
        %v1426 = vmul.f32 %v1098, %v1394
        %v1427 = vmul.f32 %v1100, %v1395
        %v1428 = vmul.f32 %v1102, %v1396
        %v1429 = vmul.f32 %v1104, %v1397
        %v1430 = vmul.f32 %v1106, %v1398
        %v1431 = vmul.f32 %v1108, %v1399
        %v1432 = vmul.f32 %v1110, %v1400
        %v1433 = vmul.f32 %v1112, %v1401
        %v1434 = vmul.f32 %v1114, %v1402
        %1435 = vadd.xlane.f32.xlu0 %v1308
        %v1436 = vpop.xlane.xlu0 %1435
        %1437 = vadd.xlane.f32.xlu0 %v1310
        %v1438 = vpop.xlane.xlu0 %1437
        %1439 = vadd.xlane.f32.xlu0 %v1312
        %v1440 = vpop.xlane.xlu0 %1439
        %1441 = vadd.xlane.f32.xlu0 %v1314
        %v1442 = vpop.xlane.xlu0 %1441
        %1443 = vadd.xlane.f32.xlu0 %v1316
        %v1444 = vpop.xlane.xlu0 %1443
        %1445 = vadd.xlane.f32.xlu0 %v1318
        %v1446 = vpop.xlane.xlu0 %1445
        %1447 = vadd.xlane.f32.xlu0 %v1320
        %v1448 = vpop.xlane.xlu0 %1447
        %1449 = vadd.xlane.f32.xlu0 %v1322
        %v1450 = vpop.xlane.xlu0 %1449
        %1451 = vadd.xlane.f32.xlu0 %v1324
        %v1452 = vpop.xlane.xlu0 %1451
        %1453 = vadd.xlane.f32.xlu0 %v1326
        %v1454 = vpop.xlane.xlu0 %1453
        %1455 = vadd.xlane.f32.xlu0 %v1328
        %v1456 = vpop.xlane.xlu0 %1455
        %1457 = vadd.xlane.f32.xlu0 %v1330
        %v1458 = vpop.xlane.xlu0 %1457
        %1459 = vadd.xlane.f32.xlu0 %v1332
        %v1460 = vpop.xlane.xlu0 %1459
        %1461 = vadd.xlane.f32.xlu0 %v1334
        %v1462 = vpop.xlane.xlu0 %1461
        %1463 = vadd.xlane.f32.xlu0 %v1336
        %v1464 = vpop.xlane.xlu0 %1463
        %1465 = vadd.xlane.f32.xlu0 %v1338
        %v1466 = vpop.xlane.xlu0 %1465
        %1467 = vadd.xlane.f32.xlu0 %v1340
        %v1468 = vpop.xlane.xlu0 %1467
        %1469 = vadd.xlane.f32.xlu0 %v1342
        %v1470 = vpop.xlane.xlu0 %1469
        %1471 = vadd.xlane.f32.xlu0 %v1344
        %v1472 = vpop.xlane.xlu0 %1471
        %1473 = vadd.xlane.f32.xlu0 %v1346
        %v1474 = vpop.xlane.xlu0 %1473
        %1475 = vadd.xlane.f32.xlu0 %v1348
        %v1476 = vpop.xlane.xlu0 %1475
        %1477 = vadd.xlane.f32.xlu0 %v1350
        %v1478 = vpop.xlane.xlu0 %1477
        %1479 = vadd.xlane.f32.xlu0 %v1352
        %v1480 = vpop.xlane.xlu0 %1479
        %1481 = vadd.xlane.f32.xlu0 %v1354
        %v1482 = vpop.xlane.xlu0 %1481
        %1483 = vadd.xlane.f32.xlu0 %v1356
        %v1484 = vpop.xlane.xlu0 %1483
        %1485 = vadd.xlane.f32.xlu0 %v1358
        %v1486 = vpop.xlane.xlu0 %1485
        %1487 = vadd.xlane.f32.xlu0 %v1360
        %v1488 = vpop.xlane.xlu0 %1487
        %1489 = vadd.xlane.f32.xlu0 %v1362
        %v1490 = vpop.xlane.xlu0 %1489
        %1491 = vadd.xlane.f32.xlu0 %v1364
        %v1492 = vpop.xlane.xlu0 %1491
        %1493 = vadd.xlane.f32.xlu0 %v1366
        %v1494 = vpop.xlane.xlu0 %1493
        %1495 = vadd.xlane.f32.xlu0 %v1368
        %v1496 = vpop.xlane.xlu0 %1495
        %1497 = vadd.xlane.f32.xlu0 %v1370
        %v1498 = vpop.xlane.xlu0 %1497
        %v1499 = vadd.f32 %v1403, %v1436
        %v1500 = vadd.f32 %v1404, %v1438
        %v1501 = vadd.f32 %v1405, %v1440
        %v1502 = vadd.f32 %v1406, %v1442
        %v1503 = vadd.f32 %v1407, %v1444
        %v1504 = vadd.f32 %v1408, %v1446
        %v1505 = vadd.f32 %v1409, %v1448
        %v1506 = vadd.f32 %v1410, %v1450
        %v1507 = vadd.f32 %v1411, %v1452
        %v1508 = vadd.f32 %v1412, %v1454
        %v1509 = vadd.f32 %v1413, %v1456
        %v1510 = vadd.f32 %v1414, %v1458
        %v1511 = vadd.f32 %v1415, %v1460
        %v1512 = vadd.f32 %v1416, %v1462
        %v1513 = vadd.f32 %v1417, %v1464
        %v1514 = vadd.f32 %v1418, %v1466
        %v1515 = vadd.f32 %v1419, %v1468
        %v1516 = vadd.f32 %v1420, %v1470
        %v1517 = vadd.f32 %v1421, %v1472
        %v1518 = vadd.f32 %v1422, %v1474
        %v1519 = vadd.f32 %v1423, %v1476
        %v1520 = vadd.f32 %v1424, %v1478
        %v1521 = vadd.f32 %v1425, %v1480
        %v1522 = vadd.f32 %v1426, %v1482
        %v1523 = vadd.f32 %v1427, %v1484
        %v1524 = vadd.f32 %v1428, %v1486
        %v1525 = vadd.f32 %v1429, %v1488
        %v1526 = vadd.f32 %v1430, %v1490
        %v1527 = vadd.f32 %v1431, %v1492
        %v1528 = vadd.f32 %v1432, %v1494
        %v1529 = vadd.f32 %v1433, %v1496
        %v1530 = vadd.f32 %v1434, %v1498
        %vm1531 = vcmask 7168
        %1532 = vst.msk [vmem:[#allocation3] sm:$0xff] %vm1531, %v1499
        %1533 = vst.msk [vmem:[#allocation3 + $0x8] sm:$0xff] %vm1531, %v1500
        %1534 = vst.msk [vmem:[#allocation3 + $0x10] sm:$0xff] %vm1531, %v1501
        %1535 = vst.msk [vmem:[#allocation3 + $0x18] sm:$0xff] %vm1531, %v1502
        %1536 = vst.msk [vmem:[#allocation3 + $0x20] sm:$0xff] %vm1531, %v1503
        %1537 = vst.msk [vmem:[#allocation3 + $0x28] sm:$0xff] %vm1531, %v1504
        %1538 = vst.msk [vmem:[#allocation3 + $0x30] sm:$0xff] %vm1531, %v1505
        %1539 = vst.msk [vmem:[#allocation3 + $0x38] sm:$0xff] %vm1531, %v1506
        %1540 = vst.msk [vmem:[#allocation3 + $0x40] sm:$0xff] %vm1531, %v1507
        %1541 = vst.msk [vmem:[#allocation3 + $0x48] sm:$0xff] %vm1531, %v1508
        %1542 = vst.msk [vmem:[#allocation3 + $0x50] sm:$0xff] %vm1531, %v1509
        %1543 = vst.msk [vmem:[#allocation3 + $0x58] sm:$0xff] %vm1531, %v1510
        %1544 = vst.msk [vmem:[#allocation3 + $0x60] sm:$0xff] %vm1531, %v1511
        %1545 = vst.msk [vmem:[#allocation3 + $0x68] sm:$0xff] %vm1531, %v1512
        %1546 = vst.msk [vmem:[#allocation3 + $0x70] sm:$0xff] %vm1531, %v1513
        %1547 = vst.msk [vmem:[#allocation3 + $0x78] sm:$0xff] %vm1531, %v1514
        %1548 = vst.msk [vmem:[#allocation3 + $0x80] sm:$0xff] %vm1531, %v1515
        %1549 = vst.msk [vmem:[#allocation3 + $0x88] sm:$0xff] %vm1531, %v1516
        %1550 = vst.msk [vmem:[#allocation3 + $0x90] sm:$0xff] %vm1531, %v1517
        %1551 = vst.msk [vmem:[#allocation3 + $0x98] sm:$0xff] %vm1531, %v1518
        %1552 = vst.msk [vmem:[#allocation3 + $0xa0] sm:$0xff] %vm1531, %v1519
        %1553 = vst.msk [vmem:[#allocation3 + $0xa8] sm:$0xff] %vm1531, %v1520
        %1554 = vst.msk [vmem:[#allocation3 + $0xb0] sm:$0xff] %vm1531, %v1521
        %1555 = vst.msk [vmem:[#allocation3 + $0xb8] sm:$0xff] %vm1531, %v1522
        %1556 = vst.msk [vmem:[#allocation3 + $0xc0] sm:$0xff] %vm1531, %v1523
        %1557 = vst.msk [vmem:[#allocation3 + $0xc8] sm:$0xff] %vm1531, %v1524
        %1558 = vst.msk [vmem:[#allocation3 + $0xd0] sm:$0xff] %vm1531, %v1525
        %1559 = vst.msk [vmem:[#allocation3 + $0xd8] sm:$0xff] %vm1531, %v1526
        %1560 = vst.msk [vmem:[#allocation3 + $0xe0] sm:$0xff] %vm1531, %v1527
        %1561 = vst.msk [vmem:[#allocation3 + $0xe8] sm:$0xff] %vm1531, %v1528
        %1562 = vst.msk [vmem:[#allocation3 + $0xf0] sm:$0xff] %vm1531, %v1529
        %1563 = vst.msk [vmem:[#allocation3 + $0xf8] sm:$0xff] %vm1531, %v1530
        %1564 = vst.msk [vmem:[#allocation2] sm:$0xff] %vm1531, %v987
        %1565 = vst.msk [vmem:[#allocation2 + $0x8] sm:$0xff] %vm1531, %v988
        %1566 = vst.msk [vmem:[#allocation2 + $0x10] sm:$0xff] %vm1531, %v989
        %1567 = vst.msk [vmem:[#allocation2 + $0x18] sm:$0xff] %vm1531, %v990
        %1568 = vst.msk [vmem:[#allocation2 + $0x20] sm:$0xff] %vm1531, %v991
        %1569 = vst.msk [vmem:[#allocation2 + $0x28] sm:$0xff] %vm1531, %v992
        %1570 = vst.msk [vmem:[#allocation2 + $0x30] sm:$0xff] %vm1531, %v993
        %1571 = vst.msk [vmem:[#allocation2 + $0x38] sm:$0xff] %vm1531, %v994
        %1572 = vst.msk [vmem:[#allocation2 + $0x40] sm:$0xff] %vm1531, %v995
        %1573 = vst.msk [vmem:[#allocation2 + $0x48] sm:$0xff] %vm1531, %v996
        %1574 = vst.msk [vmem:[#allocation2 + $0x50] sm:$0xff] %vm1531, %v997
        %1575 = vst.msk [vmem:[#allocation2 + $0x58] sm:$0xff] %vm1531, %v998
        %1576 = vst.msk [vmem:[#allocation2 + $0x60] sm:$0xff] %vm1531, %v999
        %1577 = vst.msk [vmem:[#allocation2 + $0x68] sm:$0xff] %vm1531, %v1000
        %1578 = vst.msk [vmem:[#allocation2 + $0x70] sm:$0xff] %vm1531, %v1001
        %1579 = vst.msk [vmem:[#allocation2 + $0x78] sm:$0xff] %vm1531, %v1002
        %1580 = vst.msk [vmem:[#allocation2 + $0x80] sm:$0xff] %vm1531, %v1003
        %1581 = vst.msk [vmem:[#allocation2 + $0x88] sm:$0xff] %vm1531, %v1004
        %1582 = vst.msk [vmem:[#allocation2 + $0x90] sm:$0xff] %vm1531, %v1005
        %1583 = vst.msk [vmem:[#allocation2 + $0x98] sm:$0xff] %vm1531, %v1006
        %1584 = vst.msk [vmem:[#allocation2 + $0xa0] sm:$0xff] %vm1531, %v1007
        %1585 = vst.msk [vmem:[#allocation2 + $0xa8] sm:$0xff] %vm1531, %v1008
        %1586 = vst.msk [vmem:[#allocation2 + $0xb0] sm:$0xff] %vm1531, %v1009
        %1587 = vst.msk [vmem:[#allocation2 + $0xb8] sm:$0xff] %vm1531, %v1010
        %1588 = vst.msk [vmem:[#allocation2 + $0xc0] sm:$0xff] %vm1531, %v1011
        %1589 = vst.msk [vmem:[#allocation2 + $0xc8] sm:$0xff] %vm1531, %v1012
        %1590 = vst.msk [vmem:[#allocation2 + $0xd0] sm:$0xff] %vm1531, %v1013
        %1591 = vst.msk [vmem:[#allocation2 + $0xd8] sm:$0xff] %vm1531, %v1014
        %1592 = vst.msk [vmem:[#allocation2 + $0xe0] sm:$0xff] %vm1531, %v1015
        %1593 = vst.msk [vmem:[#allocation2 + $0xe8] sm:$0xff] %vm1531, %v1016
        %1594 = vst.msk [vmem:[#allocation2 + $0xf0] sm:$0xff] %vm1531, %v1017
        %1595 = vst.msk [vmem:[#allocation2 + $0xf8] sm:$0xff] %vm1531, %v1018
        %v1596 = vld [vmem:[%s281] sm:$0xff]
        %v1597 = vld [vmem:[%s281 + $0x8] sm:$0xff]
        %v1598 = vld [vmem:[%s281 + $0x10] sm:$0xff]
        %v1599 = vld [vmem:[%s281 + $0x18] sm:$0xff]
        %1600 = vmatprep.subr.mxu0 0.0
        %1601 = vmatpush1.xpose.msra.mxu0 %v1308
        %1602 = vmatprep.subr.mxu0 0.0
        %1603 = vmatpush1.xpose.msra.mxu0 %v1310
        %1604 = vmatprep.subr.mxu0 0.0
        %1605 = vmatpush1.xpose.msra.mxu0 %v1312
        %1606 = vmatprep.subr.mxu0 0.0
        %1607 = vmatpush1.xpose.msra.mxu0 %v1314
        %1608 = vmatprep.subr.mxu0 0.0
        %1609 = vmatpush1.xpose.msra.mxu0 %v1316
        %1610 = vmatprep.subr.mxu0 0.0
        %1611 = vmatpush1.xpose.msra.mxu0 %v1318
        %1612 = vmatprep.subr.mxu0 0.0
        %1613 = vmatpush1.xpose.msra.mxu0 %v1320
        %1614 = vmatprep.subr.mxu0 0.0
        %1615 = vmatpush1.xpose.msra.mxu0 %v1322
        %1616 = vmatprep.subr.mxu0 0.0
        %1617 = vmatpush1.xpose.msra.mxu0 %v1324
        %1618 = vmatprep.subr.mxu0 0.0
        %1619 = vmatpush1.xpose.msra.mxu0 %v1326
        %1620 = vmatprep.subr.mxu0 0.0
        %1621 = vmatpush1.xpose.msra.mxu0 %v1328
        %1622 = vmatprep.subr.mxu0 0.0
        %1623 = vmatpush1.xpose.msra.mxu0 %v1330
        %1624 = vmatprep.subr.mxu0 0.0
        %1625 = vmatpush1.xpose.msra.mxu0 %v1332
        %1626 = vmatprep.subr.mxu0 0.0
        %1627 = vmatpush1.xpose.msra.mxu0 %v1334
        %1628 = vmatprep.subr.mxu0 0.0
        %1629 = vmatpush1.xpose.msra.mxu0 %v1336
        %1630 = vmatprep.subr.mxu0 0.0
        %1631 = vmatpush1.xpose.msra.mxu0 %v1338
        %1632 = vmatprep.subr.mxu0 0.0
        %1633 = vmatpush1.xpose.msra.mxu0 0.0
        %1634 = vmatprep.subr.mxu0 0.0
        %1635 = vmatpush1.xpose.msra.mxu0 0.0
        %1636 = vmatprep.subr.mxu0 0.0
        %1637 = vmatpush1.xpose.msra.mxu0 0.0
        %1638 = vmatprep.subr.mxu0 0.0
        %1639 = vmatpush1.xpose.msra.mxu0 0.0
        %1640 = vmatprep.subr.mxu0 0.0
        %1641 = vmatpush1.xpose.msra.mxu0 0.0
        %1642 = vmatprep.subr.mxu0 0.0
        %1643 = vmatpush1.xpose.msra.mxu0 0.0
        %1644 = vmatprep.subr.mxu0 0.0
        %1645 = vmatpush1.xpose.msra.mxu0 0.0
        %1646 = vmatprep.subr.mxu0 0.0
        %1647 = vmatpush1.xpose.msra.mxu0 0.0
        %1648 = vmatprep.subr.mxu0 0.0
        %1649 = vmatpush1.xpose.msra.mxu0 0.0
        %1650 = vmatprep.subr.mxu0 0.0
        %1651 = vmatpush1.xpose.msra.mxu0 0.0
        %1652 = vmatprep.subr.mxu0 0.0
        %1653 = vmatpush1.xpose.msra.mxu0 0.0
        %1654 = vmatprep.subr.mxu0 0.0
        %1655 = vmatpush1.xpose.msra.mxu0 0.0
        %1656 = vmatprep.subr.mxu0 0.0
        %1657 = vmatpush1.xpose.msra.mxu0 0.0
        %1658 = vmatprep.subr.mxu0 0.0
        %1659 = vmatpush1.xpose.msra.mxu0 0.0
        %1660 = vmatprep.subr.mxu0 0.0
        %1661 = vmatpush1.xpose.msra.mxu0 0.0
        %1662 = vmatprep.subr.mxu0 0.0
        %1663 = vmatpush1.xpose.msra.mxu0 0.0
        %1664 = vmatprep.mubr.f32.mxu0 0.0
        %1665 = vmatmul.mubr.f32.gmra.mrb[0].mxu0 %v1596
        %v1666 = vpop.f32.mrb[0].mxu0
        %v1667 = vadd.f32 0.0, %v1666
        %v1668 = vpop.f32.mrb[0].mxu0
        %1669 = vmatprep.mubr.f32.mxu0 0.0
        %1670 = vmatmul.mubr.f32.gmra.mrb[0].mxu0 %v1597
        %v1671 = vpop.f32.mrb[0].mxu0
        %v1672 = vadd.f32 0.0, %v1671
        %v1673 = vpop.f32.mrb[0].mxu0
        %1674 = vdwg.mxu0
        %1675 = vmatprep.subr.mxu0 0.0
        %1676 = vmatpush1.xpose.msra.mxu0 %v1340
        %1677 = vmatprep.subr.mxu0 0.0
        %1678 = vmatpush1.xpose.msra.mxu0 %v1342
        %1679 = vmatprep.subr.mxu0 0.0
        %1680 = vmatpush1.xpose.msra.mxu0 %v1344
        %1681 = vmatprep.subr.mxu0 0.0
        %1682 = vmatpush1.xpose.msra.mxu0 %v1346
        %1683 = vmatprep.subr.mxu0 0.0
        %1684 = vmatpush1.xpose.msra.mxu0 %v1348
        %1685 = vmatprep.subr.mxu0 0.0
        %1686 = vmatpush1.xpose.msra.mxu0 %v1350
        %1687 = vmatprep.subr.mxu0 0.0
        %1688 = vmatpush1.xpose.msra.mxu0 %v1352
        %1689 = vmatprep.subr.mxu0 0.0
        %1690 = vmatpush1.xpose.msra.mxu0 %v1354
        %1691 = vmatprep.subr.mxu0 0.0
        %1692 = vmatpush1.xpose.msra.mxu0 %v1356
        %1693 = vmatprep.subr.mxu0 0.0
        %1694 = vmatpush1.xpose.msra.mxu0 %v1358
        %1695 = vmatprep.subr.mxu0 0.0
        %1696 = vmatpush1.xpose.msra.mxu0 %v1360
        %1697 = vmatprep.subr.mxu0 0.0
        %1698 = vmatpush1.xpose.msra.mxu0 %v1362
        %1699 = vmatprep.subr.mxu0 0.0
        %1700 = vmatpush1.xpose.msra.mxu0 %v1364
        %1701 = vmatprep.subr.mxu0 0.0
        %1702 = vmatpush1.xpose.msra.mxu0 %v1366
        %1703 = vmatprep.subr.mxu0 0.0
        %1704 = vmatpush1.xpose.msra.mxu0 %v1368
        %1705 = vmatprep.subr.mxu0 0.0
        %1706 = vmatpush1.xpose.msra.mxu0 %v1370
        %1707 = vmatprep.subr.mxu0 0.0
        %1708 = vmatpush1.xpose.msra.mxu0 0.0
        %1709 = vmatprep.subr.mxu0 0.0
        %1710 = vmatpush1.xpose.msra.mxu0 0.0
        %1711 = vmatprep.subr.mxu0 0.0
        %1712 = vmatpush1.xpose.msra.mxu0 0.0
        %1713 = vmatprep.subr.mxu0 0.0
        %1714 = vmatpush1.xpose.msra.mxu0 0.0
        %1715 = vmatprep.subr.mxu0 0.0
        %1716 = vmatpush1.xpose.msra.mxu0 0.0
        %1717 = vmatprep.subr.mxu0 0.0
        %1718 = vmatpush1.xpose.msra.mxu0 0.0
        %1719 = vmatprep.subr.mxu0 0.0
        %1720 = vmatpush1.xpose.msra.mxu0 0.0
        %1721 = vmatprep.subr.mxu0 0.0
        %1722 = vmatpush1.xpose.msra.mxu0 0.0
        %1723 = vmatprep.subr.mxu0 0.0
        %1724 = vmatpush1.xpose.msra.mxu0 0.0
        %1725 = vmatprep.subr.mxu0 0.0
        %1726 = vmatpush1.xpose.msra.mxu0 0.0
        %1727 = vmatprep.subr.mxu0 0.0
        %1728 = vmatpush1.xpose.msra.mxu0 0.0
        %1729 = vmatprep.subr.mxu0 0.0
        %1730 = vmatpush1.xpose.msra.mxu0 0.0
        %1731 = vmatprep.subr.mxu0 0.0
        %1732 = vmatpush1.xpose.msra.mxu0 0.0
        %1733 = vmatprep.subr.mxu0 0.0
        %1734 = vmatpush1.xpose.msra.mxu0 0.0
        %1735 = vmatprep.subr.mxu0 0.0
        %1736 = vmatpush1.xpose.msra.mxu0 0.0
        %1737 = vmatprep.subr.mxu0 0.0
        %1738 = vmatpush1.xpose.msra.mxu0 0.0
        %1739 = vmatprep.mubr.f32.mxu0 0.0
        %1740 = vmatmul.mubr.f32.gmra.mrb[0].mxu0 %v1598
        %v1741 = vpop.f32.mrb[0].mxu0
        %v1742 = vadd.f32 0.0, %v1741
        %v1743 = vpop.f32.mrb[0].mxu0
        %1744 = vmatprep.mubr.f32.mxu0 0.0
        %1745 = vmatmul.mubr.f32.gmra.mrb[0].mxu0 %v1599
        %v1746 = vpop.f32.mrb[0].mxu0
        %v1747 = vadd.f32 0.0, %v1746
        %v1748 = vpop.f32.mrb[0].mxu0
        %1749 = vdwg.mxu0
        %1750 = vxpose.xlu0.b32.start [1/16] %v1052, 128
        %1751 = vxpose.xlu0.b32.cont [2/16] %v1054, 128
        %1752 = vxpose.xlu0.b32.cont [3/16] %v1056, 128
        %1753 = vxpose.xlu0.b32.cont [4/16] %v1058, 128
        %1754 = vxpose.xlu0.b32.cont [5/16] %v1060, 128
        %1755 = vxpose.xlu0.b32.cont [6/16] %v1062, 128
        %1756 = vxpose.xlu0.b32.cont [7/16] %v1064, 128
        %1757 = vxpose.xlu0.b32.cont [8/16] %v1066, 128
        %1758 = vxpose.xlu0.b32.cont [9/16] %v1068, 128
        %1759 = vxpose.xlu0.b32.cont [10/16] %v1070, 128
        %1760 = vxpose.xlu0.b32.cont [11/16] %v1072, 128
        %1761 = vxpose.xlu0.b32.cont [12/16] %v1074, 128
        %1762 = vxpose.xlu0.b32.cont [13/16] %v1076, 128
        %1763 = vxpose.xlu0.b32.cont [14/16] %v1078, 128
        %1764 = vxpose.xlu0.b32.cont [15/16] %v1080, 128
        %1765 = vxpose.xlu0.b32.end [16/16] %v1082, 128
        %v1766 = vpop.trf.xlu0
        %v1767 = vpop.trf.xlu0
        %v1768 = vpop.trf.xlu0
        %v1769 = vpop.trf.xlu0
        %v1770 = vpop.trf.xlu0
        %v1771 = vpop.trf.xlu0
        %v1772 = vpop.trf.xlu0
        %v1773 = vpop.trf.xlu0
        %v1774 = vpop.trf.xlu0
        %v1775 = vpop.trf.xlu0
        %v1776 = vpop.trf.xlu0
        %v1777 = vpop.trf.xlu0
        %v1778 = vpop.trf.xlu0
        %v1779 = vpop.trf.xlu0
        %v1780 = vpop.trf.xlu0
        %v1781 = vpop.trf.xlu0
        %1782 = vxpose.xlu0.b32.start [1/16] %v1084, 128
        %1783 = vxpose.xlu0.b32.cont [2/16] %v1086, 128
        %1784 = vxpose.xlu0.b32.cont [3/16] %v1088, 128
        %1785 = vxpose.xlu0.b32.cont [4/16] %v1090, 128
        %1786 = vxpose.xlu0.b32.cont [5/16] %v1092, 128
        %1787 = vxpose.xlu0.b32.cont [6/16] %v1094, 128
        %1788 = vxpose.xlu0.b32.cont [7/16] %v1096, 128
        %1789 = vxpose.xlu0.b32.cont [8/16] %v1098, 128
        %1790 = vxpose.xlu0.b32.cont [9/16] %v1100, 128
        %1791 = vxpose.xlu0.b32.cont [10/16] %v1102, 128
        %1792 = vxpose.xlu0.b32.cont [11/16] %v1104, 128
        %1793 = vxpose.xlu0.b32.cont [12/16] %v1106, 128
        %1794 = vxpose.xlu0.b32.cont [13/16] %v1108, 128
        %1795 = vxpose.xlu0.b32.cont [14/16] %v1110, 128
        %1796 = vxpose.xlu0.b32.cont [15/16] %v1112, 128
        %1797 = vxpose.xlu0.b32.end [16/16] %v1114, 128
        %v1798 = vpop.trf.xlu0
        %v1799 = vpop.trf.xlu0
        %v1800 = vpop.trf.xlu0
        %v1801 = vpop.trf.xlu0
        %v1802 = vpop.trf.xlu0
        %v1803 = vpop.trf.xlu0
        %v1804 = vpop.trf.xlu0
        %v1805 = vpop.trf.xlu0
        %v1806 = vpop.trf.xlu0
        %v1807 = vpop.trf.xlu0
        %v1808 = vpop.trf.xlu0
        %v1809 = vpop.trf.xlu0
        %v1810 = vpop.trf.xlu0
        %v1811 = vpop.trf.xlu0
        %v1812 = vpop.trf.xlu0
        %v1813 = vpop.trf.xlu0
        %v1814 = vld [vmem:[#allocation4] sm:$0xff]
        %v1815 = vld [vmem:[#allocation4 + $0x8] sm:$0xff]
        %v1816 = vld [vmem:[#allocation4 + $0x10] sm:$0xff]
        %v1817 = vld [vmem:[#allocation4 + $0x18] sm:$0xff]
        %v1818 = vlaneseq
        %v1819 = vshrl.u32 %v1818, 7
        %v1820 = vsub.s32 0, %v1819
        %v1821 = vrot.slane %v1766, %v1820
        %v1822 = vlaneseq
        %v1823 = vshrl.u32 %v1822, 7
        %v1824 = vsub.s32 0, %v1823
        %v1825 = vrot.slane %v1798, %v1824
        %v1826 = vmul.f32 %v1821, %v1814
        %v1827 = vmul.f32 %v1821, %v1815
        %v1828 = vmul.f32 %v1825, %v1816
        %v1829 = vmul.f32 %v1825, %v1817
        %v1830 = vadd.f32 %v1826, %v1667
        %v1831 = vadd.f32 %v1827, %v1672
        %v1832 = vadd.f32 %v1828, %v1742
        %v1833 = vadd.f32 %v1829, %v1747
        %1834 = vst [vmem:[#allocation4] sm:$0xff] %v1830
        %1835 = vst [vmem:[#allocation4 + $0x8] sm:$0xff] %v1831
        %1836 = vst [vmem:[#allocation4 + $0x10] sm:$0xff] %v1832
        %1837 = vst [vmem:[#allocation4 + $0x18] sm:$0xff] %v1833
        // Predicated region
        $region45: #{tpu_custom_call.1} parent=31 // pred_check
          %p1838 = pneg %p284
        $region46: #{tpu_custom_call.1} parent=31 // pred_check_branch
          %1840 = sbr.rel (%p1838) target = $region48
        $region47: #{tpu_custom_call.1} parent=31 // pred_region
          %v1841 = vld [vmem:[#allocation3] sm:$0xff]
          %v1842 = vld [vmem:[#allocation3 + $0x8] sm:$0xff]
          %v1843 = vld [vmem:[#allocation3 + $0x10] sm:$0xff]
          %v1844 = vld [vmem:[#allocation3 + $0x18] sm:$0xff]
          %v1845 = vld [vmem:[#allocation3 + $0x20] sm:$0xff]
          %v1846 = vld [vmem:[#allocation3 + $0x28] sm:$0xff]
          %v1847 = vld [vmem:[#allocation3 + $0x30] sm:$0xff]
          %v1848 = vld [vmem:[#allocation3 + $0x38] sm:$0xff]
          %v1849 = vld [vmem:[#allocation3 + $0x40] sm:$0xff]
          %v1850 = vld [vmem:[#allocation3 + $0x48] sm:$0xff]
          %v1851 = vld [vmem:[#allocation3 + $0x50] sm:$0xff]
          %v1852 = vld [vmem:[#allocation3 + $0x58] sm:$0xff]
          %v1853 = vld [vmem:[#allocation3 + $0x60] sm:$0xff]
          %v1854 = vld [vmem:[#allocation3 + $0x68] sm:$0xff]
          %v1855 = vld [vmem:[#allocation3 + $0x70] sm:$0xff]
          %v1856 = vld [vmem:[#allocation3 + $0x78] sm:$0xff]
          %v1857 = vld [vmem:[#allocation3 + $0x80] sm:$0xff]
          %v1858 = vld [vmem:[#allocation3 + $0x88] sm:$0xff]
          %v1859 = vld [vmem:[#allocation3 + $0x90] sm:$0xff]
          %v1860 = vld [vmem:[#allocation3 + $0x98] sm:$0xff]
          %v1861 = vld [vmem:[#allocation3 + $0xa0] sm:$0xff]
          %v1862 = vld [vmem:[#allocation3 + $0xa8] sm:$0xff]
          %v1863 = vld [vmem:[#allocation3 + $0xb0] sm:$0xff]
          %v1864 = vld [vmem:[#allocation3 + $0xb8] sm:$0xff]
          %v1865 = vld [vmem:[#allocation3 + $0xc0] sm:$0xff]
          %v1866 = vld [vmem:[#allocation3 + $0xc8] sm:$0xff]
          %v1867 = vld [vmem:[#allocation3 + $0xd0] sm:$0xff]
          %v1868 = vld [vmem:[#allocation3 + $0xd8] sm:$0xff]
          %v1869 = vld [vmem:[#allocation3 + $0xe0] sm:$0xff]
          %v1870 = vld [vmem:[#allocation3 + $0xe8] sm:$0xff]
          %v1871 = vld [vmem:[#allocation3 + $0xf0] sm:$0xff]
          %v1872 = vld [vmem:[#allocation3 + $0xf8] sm:$0xff]
          %v1873 = vrcp.pop %v1841
          %v1874 = vrcp.pop %v1842
          %v1875 = vrcp.pop %v1843
          %v1876 = vrcp.pop %v1844
          %v1877 = vrcp.pop %v1845
          %v1878 = vrcp.pop %v1846
          %v1879 = vrcp.pop %v1847
          %v1880 = vrcp.pop %v1848
          %v1881 = vrcp.pop %v1849
          %v1882 = vrcp.pop %v1850
          %v1883 = vrcp.pop %v1851
          %v1884 = vrcp.pop %v1852
          %v1885 = vrcp.pop %v1853
          %v1886 = vrcp.pop %v1854
          %v1887 = vrcp.pop %v1855
          %v1888 = vrcp.pop %v1856
          %v1889 = vrcp.pop %v1857
          %v1890 = vrcp.pop %v1858
          %v1891 = vrcp.pop %v1859
          %v1892 = vrcp.pop %v1860
          %v1893 = vrcp.pop %v1861
          %v1894 = vrcp.pop %v1862
          %v1895 = vrcp.pop %v1863
          %v1896 = vrcp.pop %v1864
          %v1897 = vrcp.pop %v1865
          %v1898 = vrcp.pop %v1866
          %v1899 = vrcp.pop %v1867
          %v1900 = vrcp.pop %v1868
          %v1901 = vrcp.pop %v1869
          %v1902 = vrcp.pop %v1870
          %v1903 = vrcp.pop %v1871
          %v1904 = vrcp.pop %v1872
          %1905 = vxpose.xlu0.b32.start [1/16] %v1873, 128
          %1906 = vxpose.xlu0.b32.cont [2/16] %v1874, 128
          %1907 = vxpose.xlu0.b32.cont [3/16] %v1875, 128
          %1908 = vxpose.xlu0.b32.cont [4/16] %v1876, 128
          %1909 = vxpose.xlu0.b32.cont [5/16] %v1877, 128
          %1910 = vxpose.xlu0.b32.cont [6/16] %v1878, 128
          %1911 = vxpose.xlu0.b32.cont [7/16] %v1879, 128
          %1912 = vxpose.xlu0.b32.cont [8/16] %v1880, 128
          %1913 = vxpose.xlu0.b32.cont [9/16] %v1881, 128
          %1914 = vxpose.xlu0.b32.cont [10/16] %v1882, 128
          %1915 = vxpose.xlu0.b32.cont [11/16] %v1883, 128
          %1916 = vxpose.xlu0.b32.cont [12/16] %v1884, 128
          %1917 = vxpose.xlu0.b32.cont [13/16] %v1885, 128
          %1918 = vxpose.xlu0.b32.cont [14/16] %v1886, 128
          %1919 = vxpose.xlu0.b32.cont [15/16] %v1887, 128
          %1920 = vxpose.xlu0.b32.end [16/16] %v1888, 128
          %v1921 = vpop.trf.xlu0
          %v1922 = vpop.trf.xlu0
          %v1923 = vpop.trf.xlu0
          %v1924 = vpop.trf.xlu0
          %v1925 = vpop.trf.xlu0
          %v1926 = vpop.trf.xlu0
          %v1927 = vpop.trf.xlu0
          %v1928 = vpop.trf.xlu0
          %v1929 = vpop.trf.xlu0
          %v1930 = vpop.trf.xlu0
          %v1931 = vpop.trf.xlu0
          %v1932 = vpop.trf.xlu0
          %v1933 = vpop.trf.xlu0
          %v1934 = vpop.trf.xlu0
          %v1935 = vpop.trf.xlu0
          %v1936 = vpop.trf.xlu0
          %1937 = vxpose.xlu0.b32.start [1/16] %v1889, 128
          %1938 = vxpose.xlu0.b32.cont [2/16] %v1890, 128
          %1939 = vxpose.xlu0.b32.cont [3/16] %v1891, 128
          %1940 = vxpose.xlu0.b32.cont [4/16] %v1892, 128
          %1941 = vxpose.xlu0.b32.cont [5/16] %v1893, 128
          %1942 = vxpose.xlu0.b32.cont [6/16] %v1894, 128
          %1943 = vxpose.xlu0.b32.cont [7/16] %v1895, 128
          %1944 = vxpose.xlu0.b32.cont [8/16] %v1896, 128
          %1945 = vxpose.xlu0.b32.cont [9/16] %v1897, 128
          %1946 = vxpose.xlu0.b32.cont [10/16] %v1898, 128
          %1947 = vxpose.xlu0.b32.cont [11/16] %v1899, 128
          %1948 = vxpose.xlu0.b32.cont [12/16] %v1900, 128
          %1949 = vxpose.xlu0.b32.cont [13/16] %v1901, 128
          %1950 = vxpose.xlu0.b32.cont [14/16] %v1902, 128
          %1951 = vxpose.xlu0.b32.cont [15/16] %v1903, 128
          %1952 = vxpose.xlu0.b32.end [16/16] %v1904, 128
          %v1953 = vpop.trf.xlu0
          %v1954 = vpop.trf.xlu0
          %v1955 = vpop.trf.xlu0
          %v1956 = vpop.trf.xlu0
          %v1957 = vpop.trf.xlu0
          %v1958 = vpop.trf.xlu0
          %v1959 = vpop.trf.xlu0
          %v1960 = vpop.trf.xlu0
          %v1961 = vpop.trf.xlu0
          %v1962 = vpop.trf.xlu0
          %v1963 = vpop.trf.xlu0
          %v1964 = vpop.trf.xlu0
          %v1965 = vpop.trf.xlu0
          %v1966 = vpop.trf.xlu0
          %v1967 = vpop.trf.xlu0
          %v1968 = vpop.trf.xlu0
          %v1969 = vld [vmem:[#allocation4] sm:$0xff]
          %v1970 = vld [vmem:[#allocation4 + $0x8] sm:$0xff]
          %v1971 = vld [vmem:[#allocation4 + $0x10] sm:$0xff]
          %v1972 = vld [vmem:[#allocation4 + $0x18] sm:$0xff]
          %v1973 = vlaneseq
          %v1974 = vshrl.u32 %v1973, 7
          %v1975 = vsub.s32 0, %v1974
          %v1976 = vrot.slane %v1921, %v1975
          %v1977 = vlaneseq
          %v1978 = vshrl.u32 %v1977, 7
          %v1979 = vsub.s32 0, %v1978
          %v1980 = vrot.slane %v1953, %v1979
          %v1981 = vmul.f32 %v1969, %v1976
          %v1982 = vmul.f32 %v1970, %v1976
          %v1983 = vmul.f32 %v1971, %v1980
          %v1984 = vmul.f32 %v1972, %v1980
          %1985 = vst [vmem:[%s250] sm:$0xff] %v1981
          %1986 = vst [vmem:[%s250 + $0x8] sm:$0xff] %v1982
          %1987 = vst [vmem:[%s250 + $0x10] sm:$0xff] %v1983
          %1988 = vst [vmem:[%s250 + $0x18] sm:$0xff] %v1984
        $region48: #{tpu_custom_call.1} parent=31 // pred_fallthru
          _
        %s1989 = sand.u32 %s130, 1
        %s1990 = scalar_lea.sflag [#allocation6], %s1989
        %s1991 = sand.u32 %s130, 1
        %s1992 = smul.addr %s1991, 32
        %s1993 = scalar_lea.vmem [#allocation5], %s1992
        // Predicated region
        $region49: #{tpu_custom_call.1} parent=31 // pred_check
          %p1994 = pneg %p140
        $region50: #{tpu_custom_call.1} parent=31 // pred_check_branch
          %1996 = sbr.rel (%p1994) target = $region52
        $region51: #{tpu_custom_call.1} parent=31 // pred_region
          %s1997 = smul.u32 2, %s22
          %s1999 = ssub.s32 512, 512
          %2000 = vsyncadd %s1990, %s1999
          %s2001 = smul.addr %s1997, 2
          %s2002 = sadd.s32 %s23, %s2001
          %s2003 = smul.addr %s2002, 128
          %s2004 = scalar_lea.hbm %s3, %s2003
          %s2005 = sshll.u32 %s1993, 4
          %s2006 = int_to_ptr.vmem [resolvable:$true] %s2005
          %2011 = dma.vmem_to_hbm [thread:$0]  %s2006, 512, %s2004, %s1990, 128, 128, 8
        $region52: #{tpu_custom_call.1} parent=31 // pred_fallthru
          _
      $region32: #{tpu_custom_call.1} parent=5 // pred_fallthru
        _
      %p2012 = scmp.le.s32.totalorder 2, %s12
      // Predicated region
      $region53: #{tpu_custom_call.1} parent=5 // pred_check
        %p2013 = pneg %p2012
      $region54: #{tpu_custom_call.1} parent=5 // pred_check_branch
        %2015 = sbr.rel (%p2013) target = $region56
      $region55: #{tpu_custom_call.1} parent=5 // pred_region
        %s2016 = ssub.s32 %s12, 2
        // Predicated region
        $region57: #{tpu_custom_call.1} parent=55 // pred_check
          %p2017 = pneg %p146
        $region58: #{tpu_custom_call.1} parent=55 // pred_check_branch
          %2019 = sbr.rel (%p2017) target = $region60
        $region59: #{tpu_custom_call.1} parent=55 // pred_region
          %s2020 = sand.u32 %s131, 1
          %s2021 = scalar_lea.sflag [#allocation6], %s2020
          %s2022 = sand.u32 %s131, 1
          %s2023 = smul.addr %s2022, 32
          %s2024 = scalar_lea.vmem [#allocation5], %s2023
          %2025 = dma.done %s2021, 512
        $region60: #{tpu_custom_call.1} parent=55 // pred_fallthru
          _
      $region56: #{tpu_custom_call.1} parent=5 // pred_fallthru
        _
    $region6: #{tpu_custom_call.1} parent=1 // loop_footer
      %s16 = sadd.s32 1, %s12
    $region7: #{tpu_custom_call.1} parent=1 // loop_footer_branch
      %11 = sbr.rel target = $region3
    $region8: #{tpu_custom_call.1} parent=1 // loop_exit
      _
    %2026 = vsyncpa [#allocation6], 1
    %s2027 = scalar_lea.sflag [#allocation6], 1
    %2028 = vsyncpa %s2027, 1

</llo_original>
